<compile_context>
chip_gen: v7x
topology: tpu7x:2x2x1
jax: 0.10.0
libtpu: 0.0.40
codegen_flags: <defaults>
</compile_context>

<pallas_src>
import numpy as np
import jax
import jax.numpy as jnp
from jax.experimental import pallas as pl
from jax.experimental.pallas import tpu as pltpu

INPUT_SIZE = 64
HIDDEN = 250      # forced by the module's forward (reversal/f*_1 expect 250)
HP = 256          # padded hidden (lane-tile aligned)
OUT_COLS = 8      # packed output columns: [o1(2) | o2(2) | o3(2) | rev(1) | pad(1)]
BM = 8            # batch rows per grid step (one f32 sublane tile)
BATCH = 64        # demo batch (multiple of BM)

# Packed slab row layouts (bias packed into a spare row; rest zero-padded to a
# 16-row multiple so bf16 sublane packing stays tile-aligned).
WFB_ROWS = INPUT_SIZE + 16     # rows 0:64 = Wf, row 64 = bf
W1B_ROWS = HP + 16             # rows 0:256 = fused layer-1 W, row 256 = fused b1
W2B_ROWS = 4 * HP + 16         # rows 0:1024 = block-diag layer-2 W, row 1024 = b2


# -----------------------------------------------------------------------------
# Kernel: 3 matmuls per 8-row batch block; weights stay resident across blocks
# -----------------------------------------------------------------------------
def _att_ff_kernel(x_ref, wfb_ref, w1b_ref, w2b_ref, out_ref):
    x = x_ref[...].astype(jnp.bfloat16)

    # trunk: f -> ReLU (dropout identity at inference); pad lanes of h stay 0
    wf = wfb_ref[0:INPUT_SIZE, :]
    bf = wfb_ref[INPUT_SIZE:INPUT_SIZE + 1, :].astype(jnp.float32)
    h = jnp.dot(x, wf, preferred_element_type=jnp.float32) + bf
    h = jnp.maximum(h, 0.0).astype(jnp.bfloat16)

    # fused first layers of [f1_1 | f2_1 | f3_1 | reversal]: one (BM,256)x(256,1024)
    w1 = w1b_ref[0:HP, :]
    b1 = w1b_ref[HP:HP + 1, :].astype(jnp.float32)
    a = jnp.dot(h, w1, preferred_element_type=jnp.float32) + b1
    a = jnp.maximum(a, 0.0).astype(jnp.bfloat16)

    # fused second layers as one block-diagonal (BM,1024)x(1024,8) matmul
    w2 = w2b_ref[0:4 * HP, :]
    b2 = w2b_ref[4 * HP:4 * HP + 1, :].astype(jnp.float32)
    out_ref[...] = jnp.dot(a, w2, preferred_element_type=jnp.float32) + b2


# -----------------------------------------------------------------------------
# Wrapper: batch grid, resident bf16 weight slabs, parallel semantics
# -----------------------------------------------------------------------------
def att_feedforward(x, packed):
    """x: (B, input_size) f32.  packed: (wfb, w1b, w2b) from pack_params().
    Returns (out1, out2, out3, out_rev)."""
    wfb, w1b, w2b = packed
    B = x.shape[0]
    Bp = ((B + BM - 1) // BM) * BM
    if Bp != B:
        x = jnp.pad(x, ((0, Bp - B), (0, 0)))

    out = pl.pallas_call(
        _att_ff_kernel,
        out_shape=jax.ShapeDtypeStruct((Bp, OUT_COLS), jnp.float32),
        grid=(Bp // BM,),
        in_specs=[
            pl.BlockSpec((BM, INPUT_SIZE), lambda i: (i, 0)),   # x: walks batch
            pl.BlockSpec(wfb.shape, lambda i: (0, 0)),          # weights: constant
            pl.BlockSpec(w1b.shape, lambda i: (0, 0)),          #  -> VMEM-resident,
            pl.BlockSpec(w2b.shape, lambda i: (0, 0)),          #  fetched once
        ],
        out_specs=pl.BlockSpec((BM, OUT_COLS), lambda i: (i, 0)),
        compiler_params=pltpu.CompilerParams(
            dimension_semantics=("parallel",)),                 # 2 TCs on v7x
    )(x, wfb, w1b, w2b)

    out = out[:B]
    # split packed lane-contiguous output into the module's four outputs
    return out[:, 0:2], out[:, 2:4], out[:, 4:6], out[:, 6:7]


# -----------------------------------------------------------------------------
# Parameter construction / packing (one-time host-side prep)
# -----------------------------------------------------------------------------
def init_params(key, input_size=INPUT_SIZE, hidden_size=HIDDEN):
    """Deterministic synthetic parameters; weights are (in, out), biases (1, out)."""
    ks = jax.random.split(key, 20)

    def lin(kw, kb, fan_in, fan_out):
        w = (jax.random.normal(kw, (fan_in, fan_out), jnp.float32)
             * (1.0 / jnp.sqrt(fan_in)))
        b = jax.random.normal(kb, (1, fan_out), jnp.float32) * 0.01
        return w, b

    wf, bf   = lin(ks[0],  ks[1],  input_size,  hidden_size)   # self.f
    wr, br   = lin(ks[2],  ks[3],  250,         hidden_size)   # self.reversal
    wro, bro = lin(ks[4],  ks[5],  hidden_size, 1)             # self.reversal_out
    w11, b11 = lin(ks[6],  ks[7],  250,         hidden_size)   # self.f1_1
    w12, b12 = lin(ks[8],  ks[9],  hidden_size, 2)             # self.f1_2
    w21, b21 = lin(ks[10], ks[11], 250,         hidden_size)   # self.f2_1
    w22, b22 = lin(ks[12], ks[13], hidden_size, 2)             # self.f2_2
    w31, b31 = lin(ks[14], ks[15], 250,         hidden_size)   # self.f3_1
    w32, b32 = lin(ks[16], ks[17], hidden_size, 2)             # self.f3_2

    return (wf, bf, wr, br, wro, bro,
            w11, b11, w12, b12,
            w21, b21, w22, b22,
            w31, b31, w32, b32)


def pack_params(p, hidden=HIDDEN, hp=HP):
    """Pack the 18 raw tensors into 3 tile-aligned bf16 slabs (biases in spare rows).
    Asserts the zero-padding / block-diagonal invariant that makes the fusion leak-free."""
    (wf, bf, wr, br, wro, bro,
     w11, b11, w12, b12,
     w21, b21, w22, b22,
     w31, b31, w32, b32) = p

    def pad_cols(w, to):
        return jnp.pad(w, ((0, 0), (0, to - w.shape[1])))

    def pad_rows(w, to):
        return jnp.pad(w, ((0, to - w.shape[0]), (0, 0)))

    # trunk slab: rows 0:64 = Wf (hidden padded 250->256), row 64 = bf, rest 0
    wfb = jnp.zeros((WFB_ROWS, hp), jnp.float32)
    wfb = wfb.at[0:INPUT_SIZE, :].set(pad_cols(wf, hp))
    wfb = wfb.at[INPUT_SIZE:INPUT_SIZE + 1, :].set(pad_cols(bf, hp))

    # fused branch first-layer slab: column blocks [f1 | f2 | f3 | reversal]
    def pad_block(w):                                          # (250,250) -> (256,256)
        return pad_cols(pad_rows(w, hp), hp)

    w1_big = jnp.concatenate(
        [pad_block(w11), pad_block(w21), pad_block(w31), pad_block(wr)], axis=1)  # (256,1024)
    b1_big = jnp.concatenate(
        [pad_cols(b11, hp), pad_cols(b21, hp), pad_cols(b31, hp), pad_cols(br, hp)],
        axis=1)                                                # (1, 1024)
    w1b = jnp.zeros((W1B_ROWS, 4 * hp), jnp.float32)
    w1b = w1b.at[0:hp, :].set(w1_big)
    w1b = w1b.at[hp:hp + 1, :].set(b1_big)

    # block-diagonal fused second-layer slab (off-block / pad rows MUST stay zero)
    w2b = jnp.zeros((W2B_ROWS, OUT_COLS), jnp.float32)
    w2b = w2b.at[0 * hp:0 * hp + hidden, 0:2].set(w12)
    w2b = w2b.at[1 * hp:1 * hp + hidden, 2:4].set(w22)
    w2b = w2b.at[2 * hp:2 * hp + hidden, 4:6].set(w32)
    w2b = w2b.at[3 * hp:3 * hp + hidden, 6:7].set(wro)
    w2b = w2b.at[4 * hp, 0:2].set(b12[0])
    w2b = w2b.at[4 * hp, 2:4].set(b22[0])
    w2b = w2b.at[4 * hp, 4:6].set(b32[0])
    w2b = w2b.at[4 * hp, 6:7].set(bro[0])

    # bf16 storage (halves weight HBM traffic); zeros stay exactly zero in bf16
    wfb = wfb.astype(jnp.bfloat16)
    w1b = w1b.astype(jnp.bfloat16)
    w2b = w2b.astype(jnp.bfloat16)

    # --- assert the zero-padding invariant that makes the fusions leak-free ---
    def _np(a):
        return np.asarray(jax.device_get(a)).astype(np.float32)

    wfb_n, w1b_n, w2b_n = _np(wfb), _np(w1b), _np(w2b)
    assert not wfb_n[:, hidden:].any(), "trunk pad columns must be zero"
    assert not wfb_n[INPUT_SIZE + 1:, :].any(), "trunk slab spare rows must be zero"
    for j in range(4):
        assert not w1b_n[:, j * hp + hidden:(j + 1) * hp].any(), \
            "layer-1 pad columns must be zero"
    assert not w1b_n[hp + 1:, :].any(), "layer-1 slab spare rows must be zero"
    allowed = np.zeros_like(w2b_n, dtype=bool)
    for j, (lo, hi) in enumerate([(0, 2), (2, 4), (4, 6), (6, 7)]):
        allowed[j * hp: j * hp + hidden, lo:hi] = True
    allowed[4 * hp, 0:7] = True
    assert not w2b_n[~allowed].any(), "layer-2 block-diagonal zero invariant violated"

    return wfb, w1b, w2b


# -----------------------------------------------------------------------------
# Pure-JAX reference (unpacked weights, f32 math)
# -----------------------------------------------------------------------------
def reference(x, p):
    (wf, bf, wr, br, wro, bro,
     w11, b11, w12, b12,
     w21, b21, w22, b22,
     w31, b31, w32, b32) = p
    h = jnp.maximum(x @ wf + bf, 0.0)
    rev = jnp.maximum(h @ wr + br, 0.0) @ wro + bro
    o1 = jnp.maximum(h @ w11 + b11, 0.0) @ w12 + b12
    o2 = jnp.maximum(h @ w21 + b21, 0.0) @ w22 + b22
    o3 = jnp.maximum(h @ w31 + b31, 0.0) @ w32 + b32
    return o1, o2, o3, rev


if __name__ == "__main__":
    key = jax.random.PRNGKey(0)
    kx, kp = jax.random.split(key)
    x = jax.random.normal(kx, (BATCH, INPUT_SIZE), jnp.float32)
    params = init_params(kp)
    packed = pack_params(params)

    run = jax.jit(att_feedforward)
    outs = run(x, packed)
    outs = jax.block_until_ready(outs)

    # compare against an f32 reference that uses the same bf16-rounded weights
    params_q = tuple(p.astype(jnp.bfloat16).astype(jnp.float32) for p in params)
    refs = reference(x, params_q)
    for o, r in zip(outs, refs):
        assert o.shape == r.shape and o.dtype == r.dtype
        assert jnp.allclose(o, r, atol=2e-2, rtol=2e-2), "mismatch vs reference"

    # TODO(synk): BatchNorm1d(50) and Softmax submodules are defined in the
    # module but never used in forward(), so they are intentionally omitted.
    print("KERNEL_OK")
</pallas_src>

<mosaic_0001>
module attributes {stable_mosaic.version = 11 : i64} {
  func.func @_att_ff_kernel(%arg0: i32, %arg1: memref<8x64xf32, #tpu.memory_space<vmem>>, %arg2: memref<80x256xbf16, #tpu.memory_space<vmem>>, %arg3: memref<272x1024xbf16, #tpu.memory_space<vmem>>, %arg4: memref<1040x8xbf16, #tpu.memory_space<vmem>>, %arg5: memref<8x8xf32, #tpu.memory_space<vmem>>) attributes {dimension_semantics = [#tpu.dimension_semantics<parallel>], iteration_bounds = array<i64: 8>, scalar_prefetch = 0 : i64, scratch_operands = 0 : i64, tpu.core_type = #tpu.core_type<tc>, window_params = [{transform_indices = @transform_0, window_bounds = array<i64: 8, 64>}, {pipeline_mode = #tpu.pipeline_mode<synchronous>, transform_indices = @transform_1, window_bounds = array<i64: 80, 256>}, {pipeline_mode = #tpu.pipeline_mode<synchronous>, transform_indices = @transform_2, window_bounds = array<i64: 272, 1024>}, {pipeline_mode = #tpu.pipeline_mode<synchronous>, transform_indices = @transform_3, window_bounds = array<i64: 1040, 8>}, {transform_indices = @transform_4, window_bounds = array<i64: 8, 8>}]} {
    %c0 = arith.constant 0 : index
    %c0_0 = arith.constant 0 : index
    %0 = vector.load %arg1[%c0, %c0_0] : memref<8x64xf32, #tpu.memory_space<vmem>>, vector<8x64xf32>
    %1 = arith.truncf %0 : vector<8x64xf32> to vector<8x64xbf16>
    %c0_1 = arith.constant 0 : index
    %c0_2 = arith.constant 0 : index
    %2 = vector.load %arg2[%c0_1, %c0_2] : memref<80x256xbf16, #tpu.memory_space<vmem>>, vector<64x256xbf16>
    %c64 = arith.constant 64 : index
    %c0_3 = arith.constant 0 : index
    %3 = vector.load %arg2[%c64, %c0_3] : memref<80x256xbf16, #tpu.memory_space<vmem>>, vector<1x256xbf16>
    %4 = arith.extf %3 : vector<1x256xbf16> to vector<1x256xf32>
    %cst = arith.constant dense<0.000000e+00> : vector<8x256xf32>
    %5 = tpu.matmul %1, %2, %cst {dimension_numbers = #tpu.dot_dimension_numbers<[1], [0], [0], [1], [0, 0, 1, 1], [], []>} : vector<8x64xbf16>, vector<64x256xbf16>, vector<8x256xf32> -> vector<8x256xf32>
    %6 = vector.broadcast %4 : vector<1x256xf32> to vector<8x256xf32>
    %7 = arith.addf %5, %6 : vector<8x256xf32>
    %cst_4 = arith.constant 0.000000e+00 : f32
    %8 = vector.broadcast %cst_4 : f32 to vector<8x256xf32>
    %9 = arith.maximumf %7, %8 : vector<8x256xf32>
    %10 = arith.truncf %9 : vector<8x256xf32> to vector<8x256xbf16>
    %c0_5 = arith.constant 0 : index
    %c0_6 = arith.constant 0 : index
    %11 = vector.load %arg3[%c0_5, %c0_6] : memref<272x1024xbf16, #tpu.memory_space<vmem>>, vector<256x1024xbf16>
    %c256 = arith.constant 256 : index
    %c0_7 = arith.constant 0 : index
    %12 = vector.load %arg3[%c256, %c0_7] : memref<272x1024xbf16, #tpu.memory_space<vmem>>, vector<1x1024xbf16>
    %13 = arith.extf %12 : vector<1x1024xbf16> to vector<1x1024xf32>
    %cst_8 = arith.constant dense<0.000000e+00> : vector<8x1024xf32>
    %14 = tpu.matmul %10, %11, %cst_8 {dimension_numbers = #tpu.dot_dimension_numbers<[1], [0], [0], [1], [0, 0, 1, 1], [], []>} : vector<8x256xbf16>, vector<256x1024xbf16>, vector<8x1024xf32> -> vector<8x1024xf32>
    %15 = vector.broadcast %13 : vector<1x1024xf32> to vector<8x1024xf32>
    %16 = arith.addf %14, %15 : vector<8x1024xf32>
    %cst_9 = arith.constant 0.000000e+00 : f32
    %17 = vector.broadcast %cst_9 : f32 to vector<8x1024xf32>
    %18 = arith.maximumf %16, %17 : vector<8x1024xf32>
    %19 = arith.truncf %18 : vector<8x1024xf32> to vector<8x1024xbf16>
    %c0_10 = arith.constant 0 : index
    %c0_11 = arith.constant 0 : index
    %20 = vector.load %arg4[%c0_10, %c0_11] : memref<1040x8xbf16, #tpu.memory_space<vmem>>, vector<1024x8xbf16>
    %c1024 = arith.constant 1024 : index
    %c0_12 = arith.constant 0 : index
    %21 = vector.load %arg4[%c1024, %c0_12] : memref<1040x8xbf16, #tpu.memory_space<vmem>>, vector<1x8xbf16>
    %22 = arith.extf %21 : vector<1x8xbf16> to vector<1x8xf32>
    %cst_13 = arith.constant dense<0.000000e+00> : vector<8x8xf32>
    %23 = tpu.matmul %19, %20, %cst_13 {dimension_numbers = #tpu.dot_dimension_numbers<[1], [0], [0], [1], [0, 0, 1, 1], [], []>} : vector<8x1024xbf16>, vector<1024x8xbf16>, vector<8x8xf32> -> vector<8x8xf32>
    %24 = vector.broadcast %22 : vector<1x8xf32> to vector<8x8xf32>
    %25 = arith.addf %23, %24 : vector<8x8xf32>
    %c0_14 = arith.constant 0 : index
    %c0_15 = arith.constant 0 : index
    %26 = vector.load %arg5[%c0_14, %c0_15] : memref<8x8xf32, #tpu.memory_space<vmem>>, vector<8x8xf32>
    tpu.vector_store %arg5[%c0_14, %c0_15], %25 {strides = array<i32>} : memref<8x8xf32, #tpu.memory_space<vmem>>, vector<8x8xf32>,
    return
  }
  func.func @transform_0(%arg0: i32) -> (i32, i32) {
    %c0_i32 = arith.constant 0 : i32
    %c0_i32_0 = arith.constant 0 : i32
    return %arg0, %c0_i32 : i32, i32
  }
  func.func @transform_1(%arg0: i32) -> (i32, i32) {
    %c0_i32 = arith.constant 0 : i32
    %c0_i32_0 = arith.constant 0 : i32
    %c0_i32_1 = arith.constant 0 : i32
    return %c0_i32, %c0_i32_0 : i32, i32
  }
  func.func @transform_2(%arg0: i32) -> (i32, i32) {
    %c0_i32 = arith.constant 0 : i32
    %c0_i32_0 = arith.constant 0 : i32
    %c0_i32_1 = arith.constant 0 : i32
    return %c0_i32, %c0_i32_0 : i32, i32
  }
  func.func @transform_3(%arg0: i32) -> (i32, i32) {
    %c0_i32 = arith.constant 0 : i32
    %c0_i32_0 = arith.constant 0 : i32
    %c0_i32_1 = arith.constant 0 : i32
    return %c0_i32, %c0_i32_0 : i32, i32
  }
  func.func @transform_4(%arg0: i32) -> (i32, i32) {
    %c0_i32 = arith.constant 0 : i32
    %c0_i32_0 = arith.constant 0 : i32
    return %arg0, %c0_i32 : i32, i32
  }
}

</mosaic_0001>

<llo_original>
// kernel: att_feedforward.1
$region0: #{att_feedforward.1}
  #allocation0 [shape = 'u32[]', space=smem, size = 0x4, offset = 0x4, fixed_abs, tag = 'smem constant byte address 0x4 - core index']
  #allocation1 [shape = 'u32[144,128]{1,0:T(1,128)}', space=vmem, size = 0x12000, scoped, tag = 'internal scratch']
  %s0 = inlined_call_operand.vmem [shape: f32[64,64], index: 0, kind: input, shape index: {}]
  %s1 = inlined_call_operand.vmem [shape: bf16[80,256], index: 1, kind: input, shape index: {}]
  %s2 = inlined_call_operand.hbm [shape: bf16[272,1024], index: 2, kind: input, shape index: {}]
  %s3 = inlined_call_operand.vmem [shape: bf16[1040,8], index: 3, kind: input, shape index: {}]
  %s4 = inlined_call_operand.vmem [shape: f32[64,8], index: 4, kind: output, shape index: {}]
  %s5 = sld [smem:[#allocation0]]
  $region53: #{att_feedforward.1} parent=0
    _
  %s7 = ssub.s32 1, %s5
  %s8 = scalar_select 0, %s7, %s5
  $region1: #{att_feedforward.1} parent=0
    #allocation2 [shape = 'u8[557056]{0}', space=vmem, size = 0x88000, scoped, tag = 'input window, operand 2, single buffered']
    #allocation3 [shape = 's32[2]{0}', space=sflag, size = 0x8, scoped, tag = 'scoped memory for att_feedforward.1']
    %9 = vsyncpa [#allocation3], 0
    loop: start=0, step=1, limit=10
    $region2: #{att_feedforward.1} parent=1 // loop_pre_header
      _
    $region3: #{att_feedforward.1} parent=1 // loop_header
      %s11 = sphi 0, %s15
      %p12 = scmp.ge.s32.totalorder %s11, 10
      %s21 = sphi 0, %s23
      %s24 = sphi 0, %s21
      %s25 = sphi 0, %s24
      %s41 = sphi 0, %s25
      %s45 = sphi 0, %s45
      %s47 = sphi 0, %s45
      %s48 = sphi 0, %s47
      %s62 = sphi 0, %s48
      %s66 = sphi 0, %s66
      %s68 = sphi 0, %s66
      %s69 = sphi 0, %s68
      %s83 = sphi 0, %s69
      %s87 = sphi 0, %s87
      %s89 = sphi 0, %s87
      %s90 = sphi 0, %s89
      %s104 = sphi 0, %s90
      %s110 = sphi 0, %s112
      %s113 = sphi 0, %s110
      %s114 = sphi 0, %s113
      %s130 = sphi 0, %s114
    $region4: #{att_feedforward.1} parent=1 // loop_header_branch
      %14 = sbr.rel (%p12) target = $region8
    $region5: #{att_feedforward.1} parent=1 // loop_body
      %s16 = ssub.s32 %s11, 1
      %s17 = ssub.s32 %s11, 2
      %s18 = sadd.s32 %s11, 1
      %s19 = ssub.s32 %s11, %s18
      %p20 = scmp.eq.s32.totalorder %s19, 0
      %s22 = sadd.s32 %s21, 1
      %s23 = scalar_select %p20, %s21, %s22
      %p26 = pneg %p20
      %p27 = scmp.eq.s32.totalorder %s11, 7
      %p28 = por %p26, %p27
      %p29 = scmp.ne.s32.totalorder %s21, %s24
      %p30 = scmp.eq.s32.totalorder %s11, 0
      %p31 = por %p29, %p30
      %p32 = scmp.ne.s32.totalorder %s21, %s24
      %p33 = scmp.eq.s32.totalorder %s16, 7
      %p34 = por %p32, %p33
      %p35 = scmp.ne.s32.totalorder %s24, %s25
      %p36 = scmp.eq.s32.totalorder %s16, 0
      %p37 = por %p35, %p36
      %p38 = scmp.ne.s32.totalorder %s24, %s25
      %p39 = scmp.eq.s32.totalorder %s17, 7
      %p40 = por %p38, %p39
      %p42 = scmp.ne.s32.totalorder %s25, %s41
      %p43 = scmp.eq.s32.totalorder %s17, 0
      %p44 = por %p42, %p43
      %s46 = sadd.s32 %s45, 1
      %p49 = scmp.eq.s32.totalorder %s11, 7
      %p50 = scmp.ne.s32.totalorder %s45, %s47
      %p51 = scmp.eq.s32.totalorder %s11, 0
      %p52 = por %p50, %p51
      %p53 = scmp.ne.s32.totalorder %s45, %s47
      %p54 = scmp.eq.s32.totalorder %s16, 7
      %p55 = por %p53, %p54
      %p56 = scmp.ne.s32.totalorder %s47, %s48
      %p57 = scmp.eq.s32.totalorder %s16, 0
      %p58 = por %p56, %p57
      %p59 = scmp.ne.s32.totalorder %s47, %s48
      %p60 = scmp.eq.s32.totalorder %s17, 7
      %p61 = por %p59, %p60
      %p63 = scmp.ne.s32.totalorder %s48, %s62
      %p64 = scmp.eq.s32.totalorder %s17, 0
      %p65 = por %p63, %p64
      %s67 = sadd.s32 %s66, 1
      %p70 = scmp.eq.s32.totalorder %s11, 7
      %p71 = scmp.ne.s32.totalorder %s66, %s68
      %p72 = scmp.eq.s32.totalorder %s11, 0
      %p73 = por %p71, %p72
      %p74 = scmp.ne.s32.totalorder %s66, %s68
      %p75 = scmp.eq.s32.totalorder %s16, 7
      %p76 = por %p74, %p75
      %p77 = scmp.ne.s32.totalorder %s68, %s69
      %p78 = scmp.eq.s32.totalorder %s16, 0
      %p79 = por %p77, %p78
      %p80 = scmp.ne.s32.totalorder %s68, %s69
      %p81 = scmp.eq.s32.totalorder %s17, 7
      %p82 = por %p80, %p81
      %p84 = scmp.ne.s32.totalorder %s69, %s83
      %p85 = scmp.eq.s32.totalorder %s17, 0
      %p86 = por %p84, %p85
      %s88 = sadd.s32 %s87, 1
      %p91 = scmp.eq.s32.totalorder %s11, 7
      %p92 = scmp.ne.s32.totalorder %s87, %s89
      %p93 = scmp.eq.s32.totalorder %s11, 0
      %p94 = por %p92, %p93
      %p95 = scmp.ne.s32.totalorder %s87, %s89
      %p96 = scmp.eq.s32.totalorder %s16, 7
      %p97 = por %p95, %p96
      %p98 = scmp.ne.s32.totalorder %s89, %s90
      %p99 = scmp.eq.s32.totalorder %s16, 0
      %p100 = por %p98, %p99
      %p101 = scmp.ne.s32.totalorder %s89, %s90
      %p102 = scmp.eq.s32.totalorder %s17, 7
      %p103 = por %p101, %p102
      %p105 = scmp.ne.s32.totalorder %s90, %s104
      %p106 = scmp.eq.s32.totalorder %s17, 0
      %p107 = por %p105, %p106
      %s108 = ssub.s32 %s11, %s18
      %p109 = scmp.eq.s32.totalorder %s108, 0
      %s111 = sadd.s32 %s110, 1
      %s112 = scalar_select %p109, %s110, %s111
      %p115 = pneg %p109
      %p116 = scmp.eq.s32.totalorder %s11, 7
      %p117 = por %p115, %p116
      %p118 = scmp.ne.s32.totalorder %s110, %s113
      %p119 = scmp.eq.s32.totalorder %s11, 0
      %p120 = por %p118, %p119
      %p121 = scmp.ne.s32.totalorder %s110, %s113
      %p122 = scmp.eq.s32.totalorder %s16, 7
      %p123 = por %p121, %p122
      %p124 = scmp.ne.s32.totalorder %s113, %s114
      %p125 = scmp.eq.s32.totalorder %s16, 0
      %p126 = por %p124, %p125
      %p127 = scmp.ne.s32.totalorder %s113, %s114
      %p128 = scmp.eq.s32.totalorder %s17, 7
      %p129 = por %p127, %p128
      %p131 = scmp.ne.s32.totalorder %s114, %s130
      %p132 = scmp.eq.s32.totalorder %s17, 0
      %p133 = por %p131, %p132
      %p134 = scmp.le.s32.totalorder 1, %s11
      %p135 = scmp.lt.s32.totalorder %s11, 9
      %p136 = pnand %p134, %p135
      %p137 = pneg %p136
      // Predicated region
      $region9: #{att_feedforward.1} parent=5 // pred_check
        _
      $region10: #{att_feedforward.1} parent=5 // pred_check_branch
        %139 = sbr.rel (%p136) target = $region12
      $region11: #{att_feedforward.1} parent=5 // pred_region
        %s140 = ssub.s32 %s11, 1
        // Predicated region
        $region13: #{att_feedforward.1} parent=11 // pred_check
          %p141 = pneg %p58
        $region14: #{att_feedforward.1} parent=11 // pred_check_branch
          %143 = sbr.rel (%p141) target = $region16
        $region15: #{att_feedforward.1} parent=11 // pred_region
          _
        $region16: #{att_feedforward.1} parent=11 // pred_fallthru
          _
        // Predicated region
        $region17: #{att_feedforward.1} parent=11 // pred_check
          %p144 = pneg %p79
        $region18: #{att_feedforward.1} parent=11 // pred_check_branch
          %146 = sbr.rel (%p144) target = $region20
        $region19: #{att_feedforward.1} parent=11 // pred_region
          %s148 = ssub.s32 17408, 17408
          %149 = vsyncadd [#allocation3], %s148
          %s150 = sshll.u32 [#allocation2], 4
          %s151 = int_to_ptr.vmem [resolvable:$true] %s150
          %156 = dma.hbm_to_vmem [thread:$0]  %s2, 17408, %s151, [#allocation3], 512, 512, 32
        $region20: #{att_feedforward.1} parent=11 // pred_fallthru
          _
        // Predicated region
        $region21: #{att_feedforward.1} parent=11 // pred_check
          %p157 = pneg %p100
        $region22: #{att_feedforward.1} parent=11 // pred_check_branch
          %159 = sbr.rel (%p157) target = $region24
        $region23: #{att_feedforward.1} parent=11 // pred_region
          _
        $region24: #{att_feedforward.1} parent=11 // pred_fallthru
          _
      $region12: #{att_feedforward.1} parent=5 // pred_fallthru
        _
      %p160 = scmp.lt.s32.totalorder %s11, 8
      // Predicated region
      $region25: #{att_feedforward.1} parent=5 // pred_check
        %p161 = pneg %p160
      $region26: #{att_feedforward.1} parent=5 // pred_check_branch
        %163 = sbr.rel (%p161) target = $region28
      $region27: #{att_feedforward.1} parent=5 // pred_region
        // Predicated region
        $region29: #{att_feedforward.1} parent=27 // pred_check
          %p164 = pneg %p31
        $region30: #{att_feedforward.1} parent=27 // pred_check_branch
          %166 = sbr.rel (%p164) target = $region32
        $region31: #{att_feedforward.1} parent=27 // pred_region
          %p167 = scmp.lt.s32.totalorder %s11, 7
          %s168 = scalar_select %p167, %s11, 7
          %s169 = smul.addr %s168, 8
          %s170 = scalar_lea.vmem %s0, %s169
        $region32: #{att_feedforward.1} parent=27 // pred_fallthru
          _
      $region28: #{att_feedforward.1} parent=5 // pred_fallthru
        _
      %p171 = scmp.le.s32.totalorder 1, %s11
      %p172 = scmp.lt.s32.totalorder %s11, 9
      %p173 = pnand %p171, %p172
      %p174 = pneg %p173
      // Predicated region
      $region33: #{att_feedforward.1} parent=5 // pred_check
        _
      $region34: #{att_feedforward.1} parent=5 // pred_check_branch
        %176 = sbr.rel (%p173) target = $region36
      $region35: #{att_feedforward.1} parent=5 // pred_region
        %s177 = ssub.s32 %s11, 1
        // Predicated region
        $region37: #{att_feedforward.1} parent=35 // pred_check
          %p178 = pneg %p79
        $region38: #{att_feedforward.1} parent=35 // pred_check_branch
          %180 = sbr.rel (%p178) target = $region40
        $region39: #{att_feedforward.1} parent=35 // pred_region
          %181 = dma.done [#allocation3], 17408
        $region40: #{att_feedforward.1} parent=35 // pred_fallthru
          _
        %p182 = scmp.lt.s32.totalorder %s16, 7
        %s183 = scalar_select %p182, %s16, 7
        %s184 = smul.addr %s183, 8
        %s185 = scalar_lea.vmem %s0, %s184
        %p186 = pneg %p37
        %p187 = pneg %p34
        %p188 = pneg %p58
        %p189 = pneg %p55
        %p190 = pneg %p79
        %p191 = pneg %p76
        %p192 = pneg %p100
        %p193 = pneg %p97
        %p194 = pneg %p126
        %p195 = pneg %p123
        %p196 = scmp.lt.s32.totalorder %s16, 7
        %s197 = scalar_select %p196, %s16, 7
        %s198 = smul.addr %s197, 8
        %s199 = scalar_lea.vmem %s4, %s198
        %p200 = scmp.lt.s32.totalorder %s16, 7
        %s201 = scalar_select %p200, %s16, 7
        %s202 = smul.addr %s201, 8
        %s203 = scalar_lea.vmem %s0, %s202
        %p204 = scmp.lt.s32.totalorder %s16, 7
        %s205 = scalar_select %p204, %s16, 7
        %s206 = smul.addr %s205, 8
        %s207 = scalar_lea.vmem %s4, %s206
        %v209 = vld [vmem:[%s203] sm:$0xff]
        %v210 = vpack.c.bf16 %v209, %v209
        %v211 = vld [vmem:[%s1] sm:$0xff]
        %v212 = vld [vmem:[%s1 + $0x8] sm:$0xff]
        %v213 = vld [vmem:[%s1 + $0x10] sm:$0xff]
        %v214 = vld [vmem:[%s1 + $0x18] sm:$0xff]
        %v215 = vld [vmem:[%s1 + $0x20] sm:$0xff]
        %v216 = vld [vmem:[%s1 + $0x28] sm:$0xff]
        %v217 = vld [vmem:[%s1 + $0x30] sm:$0xff]
        %v218 = vld [vmem:[%s1 + $0x38] sm:$0xff]
        %v219 = vld [vmem:[%s1 + $0x40] sm:$0x11]
        %v220 = vunpack.c.l.bf16 %v219
        %v221 = vunpack.c.h.bf16 %v219
        %v222 = vlaneseq
        %v223 = vshrl.u32 %v222, 7
        %v224 = vsub.s32 0, %v223
        %v225 = vrot.slane %v220, %v224
        %v226 = vlaneseq
        %v227 = vshrl.u32 %v226, 7
        %v228 = vsub.s32 0, %v227
        %v229 = vrot.slane %v221, %v228
        %v238 = vunpack.c.l.b16 %v211
        %v239 = vunpack.c.h.b16 %v211
        %v240 = vunpack.c.l.b16 %v212
        %v241 = vunpack.c.h.b16 %v212
        %v242 = vunpack.c.l.b16 %v213
        %v243 = vunpack.c.h.b16 %v213
        %v244 = vunpack.c.l.b16 %v214
        %v245 = vunpack.c.h.b16 %v214
        %v246 = vunpack.c.l.b16 %v215
        %v247 = vunpack.c.h.b16 %v215
        %v248 = vunpack.c.l.b16 %v216
        %v249 = vunpack.c.h.b16 %v216
        %v250 = vunpack.c.l.b16 %v217
        %v251 = vunpack.c.h.b16 %v217
        %v252 = vunpack.c.l.b16 %v218
        %v253 = vunpack.c.h.b16 %v218
        %v254 = vpack.c.b16 %v240, %v238
        %v255 = vpack.c.b16 %v241, %v239
        %v256 = vpack.c.b16 %v244, %v242
        %v257 = vpack.c.b16 %v245, %v243
        %v258 = vpack.c.b16 %v248, %v246
        %v259 = vpack.c.b16 %v249, %v247
        %v260 = vpack.c.b16 %v252, %v250
        %v261 = vpack.c.b16 %v253, %v251
        %vm270 = vcmask 523264
        %v272 = vsel %vm270, %v210, 0
        %274 = vmatprep.subr.bf16.mxu0 %v255
        %275 = vmatpush1.bf16.msra.mxu0 %v254
        %276 = vmatprep.subr.bf16.mxu0 %v257
        %277 = vmatpush1.bf16.msra.mxu0 %v256
        %278 = vmatprep.subr.bf16.mxu0 %v259
        %279 = vmatpush1.bf16.msra.mxu0 %v258
        %280 = vmatprep.subr.bf16.mxu0 %v261
        %281 = vmatpush1.bf16.msra.mxu0 %v260
        %282 = vmatprep.subr.bf16.mxu0 0
        %283 = vmatpush1.bf16.msra.mxu0 0
        %284 = vmatprep.subr.bf16.mxu0 0
        %285 = vmatpush1.bf16.msra.mxu0 0
        %286 = vmatprep.subr.bf16.mxu0 0
        %287 = vmatpush1.bf16.msra.mxu0 0
        %288 = vmatprep.subr.bf16.mxu0 0
        %289 = vmatpush1.bf16.msra.mxu0 0
        %290 = vmatprep.subr.bf16.mxu0 0
        %291 = vmatpush1.bf16.msra.mxu0 0
        %292 = vmatprep.subr.bf16.mxu0 0
        %293 = vmatpush1.bf16.msra.mxu0 0
        %294 = vmatprep.subr.bf16.mxu0 0
        %295 = vmatpush1.bf16.msra.mxu0 0
        %296 = vmatprep.subr.bf16.mxu0 0
        %297 = vmatpush1.bf16.msra.mxu0 0
        %298 = vmatprep.subr.bf16.mxu0 0
        %299 = vmatpush1.bf16.msra.mxu0 0
        %300 = vmatprep.subr.bf16.mxu0 0
        %301 = vmatpush1.bf16.msra.mxu0 0
        %302 = vmatprep.subr.bf16.mxu0 0
        %303 = vmatpush1.bf16.msra.mxu0 0
        %304 = vmatprep.subr.bf16.mxu0 0
        %305 = vmatpush1.bf16.msra.mxu0 0
        %306 = vmatprep.mubr.bf16.mxu0 0
        %307 = vmatmul.mubr.bf16.gmra.mrb[0].mxu0 %v272
        %v308 = vpop.f32.mrb[0].mxu0
        %v309 = vadd.f32 %v225, %v308
        %v310 = vpop.f32.mrb[0].mxu0
        %v311 = vadd.f32 %v229, %v310
        %v312 = vpop.f32.mrb[0].mxu0
        %v313 = vpop.f32.mrb[0].mxu0
        %314 = vdwg.mxu0
        %v315 = vmax.f32 %v309, 0.0
        %v316 = vmax.f32 %v311, 0.0
        %v317 = vpack.c.bf16 %v315, %v315
        %v318 = vpack.c.bf16 %v316, %v316
        %v319 = vld [vmem:[#allocation2] sm:$0xff]
        %v320 = vld [vmem:[#allocation2 + $0x8] sm:$0xff]
        %v321 = vld [vmem:[#allocation2 + $0x10] sm:$0xff]
        %v322 = vld [vmem:[#allocation2 + $0x18] sm:$0xff]
        %v323 = vld [vmem:[#allocation2 + $0x20] sm:$0xff]
        %v324 = vld [vmem:[#allocation2 + $0x28] sm:$0xff]
        %v325 = vld [vmem:[#allocation2 + $0x30] sm:$0xff]
        %v326 = vld [vmem:[#allocation2 + $0x38] sm:$0xff]
        %v327 = vld [vmem:[#allocation2 + $0x40] sm:$0xff]
        %v328 = vld [vmem:[#allocation2 + $0x48] sm:$0xff]
        %v329 = vld [vmem:[#allocation2 + $0x50] sm:$0xff]
        %v330 = vld [vmem:[#allocation2 + $0x58] sm:$0xff]
        %v331 = vld [vmem:[#allocation2 + $0x60] sm:$0xff]
        %v332 = vld [vmem:[#allocation2 + $0x68] sm:$0xff]
        %v333 = vld [vmem:[#allocation2 + $0x70] sm:$0xff]
        %v334 = vld [vmem:[#allocation2 + $0x78] sm:$0xff]
        %v335 = vld [vmem:[#allocation2 + $0x80] sm:$0xff]
        %v336 = vld [vmem:[#allocation2 + $0x88] sm:$0xff]
        %v337 = vld [vmem:[#allocation2 + $0x90] sm:$0xff]
        %v338 = vld [vmem:[#allocation2 + $0x98] sm:$0xff]
        %v339 = vld [vmem:[#allocation2 + $0xa0] sm:$0xff]
        %v340 = vld [vmem:[#allocation2 + $0xa8] sm:$0xff]
        %v341 = vld [vmem:[#allocation2 + $0xb0] sm:$0xff]
        %v342 = vld [vmem:[#allocation2 + $0xb8] sm:$0xff]
        %v343 = vld [vmem:[#allocation2 + $0xc0] sm:$0xff]
        %v344 = vld [vmem:[#allocation2 + $0xc8] sm:$0xff]
        %v345 = vld [vmem:[#allocation2 + $0xd0] sm:$0xff]
        %v346 = vld [vmem:[#allocation2 + $0xd8] sm:$0xff]
        %v347 = vld [vmem:[#allocation2 + $0xe0] sm:$0xff]
        %v348 = vld [vmem:[#allocation2 + $0xe8] sm:$0xff]
        %v349 = vld [vmem:[#allocation2 + $0xf0] sm:$0xff]
        %v350 = vld [vmem:[#allocation2 + $0xf8] sm:$0xff]
        %v351 = vld [vmem:[#allocation2 + $0x100] sm:$0xff]
        %v352 = vld [vmem:[#allocation2 + $0x108] sm:$0xff]
        %v353 = vld [vmem:[#allocation2 + $0x110] sm:$0xff]
        %v354 = vld [vmem:[#allocation2 + $0x118] sm:$0xff]
        %v355 = vld [vmem:[#allocation2 + $0x120] sm:$0xff]
        %v356 = vld [vmem:[#allocation2 + $0x128] sm:$0xff]
        %v357 = vld [vmem:[#allocation2 + $0x130] sm:$0xff]
        %v358 = vld [vmem:[#allocation2 + $0x138] sm:$0xff]
        %v359 = vld [vmem:[#allocation2 + $0x140] sm:$0xff]
        %v360 = vld [vmem:[#allocation2 + $0x148] sm:$0xff]
        %v361 = vld [vmem:[#allocation2 + $0x150] sm:$0xff]
        %v362 = vld [vmem:[#allocation2 + $0x158] sm:$0xff]
        %v363 = vld [vmem:[#allocation2 + $0x160] sm:$0xff]
        %v364 = vld [vmem:[#allocation2 + $0x168] sm:$0xff]
        %v365 = vld [vmem:[#allocation2 + $0x170] sm:$0xff]
        %v366 = vld [vmem:[#allocation2 + $0x178] sm:$0xff]
        %v367 = vld [vmem:[#allocation2 + $0x180] sm:$0xff]
        %v368 = vld [vmem:[#allocation2 + $0x188] sm:$0xff]
        %v369 = vld [vmem:[#allocation2 + $0x190] sm:$0xff]
        %v370 = vld [vmem:[#allocation2 + $0x198] sm:$0xff]
        %v371 = vld [vmem:[#allocation2 + $0x1a0] sm:$0xff]
        %v372 = vld [vmem:[#allocation2 + $0x1a8] sm:$0xff]
        %v373 = vld [vmem:[#allocation2 + $0x1b0] sm:$0xff]
        %v374 = vld [vmem:[#allocation2 + $0x1b8] sm:$0xff]
        %v375 = vld [vmem:[#allocation2 + $0x1c0] sm:$0xff]
        %v376 = vld [vmem:[#allocation2 + $0x1c8] sm:$0xff]
        %v377 = vld [vmem:[#allocation2 + $0x1d0] sm:$0xff]
        %v378 = vld [vmem:[#allocation2 + $0x1d8] sm:$0xff]
        %v379 = vld [vmem:[#allocation2 + $0x1e0] sm:$0xff]
        %v380 = vld [vmem:[#allocation2 + $0x1e8] sm:$0xff]
        %v381 = vld [vmem:[#allocation2 + $0x1f0] sm:$0xff]
        %v382 = vld [vmem:[#allocation2 + $0x1f8] sm:$0xff]
        %v383 = vld [vmem:[#allocation2 + $0x200] sm:$0xff]
        %v384 = vld [vmem:[#allocation2 + $0x208] sm:$0xff]
        %v385 = vld [vmem:[#allocation2 + $0x210] sm:$0xff]
        %v386 = vld [vmem:[#allocation2 + $0x218] sm:$0xff]
        %v387 = vld [vmem:[#allocation2 + $0x220] sm:$0xff]
        %v388 = vld [vmem:[#allocation2 + $0x228] sm:$0xff]
        %v389 = vld [vmem:[#allocation2 + $0x230] sm:$0xff]
        %v390 = vld [vmem:[#allocation2 + $0x238] sm:$0xff]
        %v391 = vld [vmem:[#allocation2 + $0x240] sm:$0xff]
        %v392 = vld [vmem:[#allocation2 + $0x248] sm:$0xff]
        %v393 = vld [vmem:[#allocation2 + $0x250] sm:$0xff]
        %v394 = vld [vmem:[#allocation2 + $0x258] sm:$0xff]
        %v395 = vld [vmem:[#allocation2 + $0x260] sm:$0xff]
        %v396 = vld [vmem:[#allocation2 + $0x268] sm:$0xff]
        %v397 = vld [vmem:[#allocation2 + $0x270] sm:$0xff]
        %v398 = vld [vmem:[#allocation2 + $0x278] sm:$0xff]
        %v399 = vld [vmem:[#allocation2 + $0x280] sm:$0xff]
        %v400 = vld [vmem:[#allocation2 + $0x288] sm:$0xff]
        %v401 = vld [vmem:[#allocation2 + $0x290] sm:$0xff]
        %v402 = vld [vmem:[#allocation2 + $0x298] sm:$0xff]
        %v403 = vld [vmem:[#allocation2 + $0x2a0] sm:$0xff]
        %v404 = vld [vmem:[#allocation2 + $0x2a8] sm:$0xff]
        %v405 = vld [vmem:[#allocation2 + $0x2b0] sm:$0xff]
        %v406 = vld [vmem:[#allocation2 + $0x2b8] sm:$0xff]
        %v407 = vld [vmem:[#allocation2 + $0x2c0] sm:$0xff]
        %v408 = vld [vmem:[#allocation2 + $0x2c8] sm:$0xff]
        %v409 = vld [vmem:[#allocation2 + $0x2d0] sm:$0xff]
        %v410 = vld [vmem:[#allocation2 + $0x2d8] sm:$0xff]
        %v411 = vld [vmem:[#allocation2 + $0x2e0] sm:$0xff]
        %v412 = vld [vmem:[#allocation2 + $0x2e8] sm:$0xff]
        %v413 = vld [vmem:[#allocation2 + $0x2f0] sm:$0xff]
        %v414 = vld [vmem:[#allocation2 + $0x2f8] sm:$0xff]
        %v415 = vld [vmem:[#allocation2 + $0x300] sm:$0xff]
        %v416 = vld [vmem:[#allocation2 + $0x308] sm:$0xff]
        %v417 = vld [vmem:[#allocation2 + $0x310] sm:$0xff]
        %v418 = vld [vmem:[#allocation2 + $0x318] sm:$0xff]
        %v419 = vld [vmem:[#allocation2 + $0x320] sm:$0xff]
        %v420 = vld [vmem:[#allocation2 + $0x328] sm:$0xff]
        %v421 = vld [vmem:[#allocation2 + $0x330] sm:$0xff]
        %v422 = vld [vmem:[#allocation2 + $0x338] sm:$0xff]
        %v423 = vld [vmem:[#allocation2 + $0x340] sm:$0xff]
        %v424 = vld [vmem:[#allocation2 + $0x348] sm:$0xff]
        %v425 = vld [vmem:[#allocation2 + $0x350] sm:$0xff]
        %v426 = vld [vmem:[#allocation2 + $0x358] sm:$0xff]
        %v427 = vld [vmem:[#allocation2 + $0x360] sm:$0xff]
        %v428 = vld [vmem:[#allocation2 + $0x368] sm:$0xff]
        %v429 = vld [vmem:[#allocation2 + $0x370] sm:$0xff]
        %v430 = vld [vmem:[#allocation2 + $0x378] sm:$0xff]
        %v431 = vld [vmem:[#allocation2 + $0x380] sm:$0xff]
        %v432 = vld [vmem:[#allocation2 + $0x388] sm:$0xff]
        %v433 = vld [vmem:[#allocation2 + $0x390] sm:$0xff]
        %v434 = vld [vmem:[#allocation2 + $0x398] sm:$0xff]
        %v435 = vld [vmem:[#allocation2 + $0x3a0] sm:$0xff]
        %v436 = vld [vmem:[#allocation2 + $0x3a8] sm:$0xff]
        %v437 = vld [vmem:[#allocation2 + $0x3b0] sm:$0xff]
        %v438 = vld [vmem:[#allocation2 + $0x3b8] sm:$0xff]
        %v439 = vld [vmem:[#allocation2 + $0x3c0] sm:$0xff]
        %v440 = vld [vmem:[#allocation2 + $0x3c8] sm:$0xff]
        %v441 = vld [vmem:[#allocation2 + $0x3d0] sm:$0xff]
        %v442 = vld [vmem:[#allocation2 + $0x3d8] sm:$0xff]
        %v443 = vld [vmem:[#allocation2 + $0x3e0] sm:$0xff]
        %v444 = vld [vmem:[#allocation2 + $0x3e8] sm:$0xff]
        %v445 = vld [vmem:[#allocation2 + $0x3f0] sm:$0xff]
        %v446 = vld [vmem:[#allocation2 + $0x3f8] sm:$0xff]
        %v447 = vld [vmem:[#allocation2 + $0x400] sm:$0x11]
        %v448 = vld [vmem:[#allocation2 + $0x408] sm:$0x11]
        %v449 = vld [vmem:[#allocation2 + $0x410] sm:$0x11]
        %v450 = vld [vmem:[#allocation2 + $0x418] sm:$0x11]
        %v451 = vunpack.c.l.bf16 %v447
        %v452 = vunpack.c.h.bf16 %v447
        %v453 = vunpack.c.l.bf16 %v448
        %v454 = vunpack.c.h.bf16 %v448
        %v455 = vunpack.c.l.bf16 %v449
        %v456 = vunpack.c.h.bf16 %v449
        %v457 = vunpack.c.l.bf16 %v450
        %v458 = vunpack.c.h.bf16 %v450
        %v459 = vlaneseq
        %v460 = vshrl.u32 %v459, 7
        %v461 = vsub.s32 0, %v460
        %v462 = vrot.slane %v451, %v461
        %v463 = vlaneseq
        %v464 = vshrl.u32 %v463, 7
        %v465 = vsub.s32 0, %v464
        %v466 = vrot.slane %v452, %v465
        %v467 = vlaneseq
        %v468 = vshrl.u32 %v467, 7
        %v469 = vsub.s32 0, %v468
        %v470 = vrot.slane %v453, %v469
        %v471 = vlaneseq
        %v472 = vshrl.u32 %v471, 7
        %v473 = vsub.s32 0, %v472
        %v474 = vrot.slane %v454, %v473
        %v475 = vlaneseq
        %v476 = vshrl.u32 %v475, 7
        %v477 = vsub.s32 0, %v476
        %v478 = vrot.slane %v455, %v477
        %v479 = vlaneseq
        %v480 = vshrl.u32 %v479, 7
        %v481 = vsub.s32 0, %v480
        %v482 = vrot.slane %v456, %v481
        %v483 = vlaneseq
        %v484 = vshrl.u32 %v483, 7
        %v485 = vsub.s32 0, %v484
        %v486 = vrot.slane %v457, %v485
        %v487 = vlaneseq
        %v488 = vshrl.u32 %v487, 7
        %v489 = vsub.s32 0, %v488
        %v490 = vrot.slane %v458, %v489
        %v619 = vunpack.c.l.b16 %v319
        %v620 = vunpack.c.h.b16 %v319
        %v621 = vunpack.c.l.b16 %v320
        %v622 = vunpack.c.h.b16 %v320
        %v623 = vunpack.c.l.b16 %v321
        %v624 = vunpack.c.h.b16 %v321
        %v625 = vunpack.c.l.b16 %v322
        %v626 = vunpack.c.h.b16 %v322
        %v627 = vunpack.c.l.b16 %v323
        %v628 = vunpack.c.h.b16 %v323
        %v629 = vunpack.c.l.b16 %v324
        %v630 = vunpack.c.h.b16 %v324
        %v631 = vunpack.c.l.b16 %v325
        %v632 = vunpack.c.h.b16 %v325
        %v633 = vunpack.c.l.b16 %v326
        %v634 = vunpack.c.h.b16 %v326
        %v635 = vunpack.c.l.b16 %v327
        %v636 = vunpack.c.h.b16 %v327
        %v637 = vunpack.c.l.b16 %v328
        %v638 = vunpack.c.h.b16 %v328
        %v639 = vunpack.c.l.b16 %v329
        %v640 = vunpack.c.h.b16 %v329
        %v641 = vunpack.c.l.b16 %v330
        %v642 = vunpack.c.h.b16 %v330
        %v643 = vunpack.c.l.b16 %v331
        %v644 = vunpack.c.h.b16 %v331
        %v645 = vunpack.c.l.b16 %v332
        %v646 = vunpack.c.h.b16 %v332
        %v647 = vunpack.c.l.b16 %v333
        %v648 = vunpack.c.h.b16 %v333
        %v649 = vunpack.c.l.b16 %v334
        %v650 = vunpack.c.h.b16 %v334
        %v651 = vunpack.c.l.b16 %v335
        %v652 = vunpack.c.h.b16 %v335
        %v653 = vunpack.c.l.b16 %v336
        %v654 = vunpack.c.h.b16 %v336
        %v655 = vunpack.c.l.b16 %v337
        %v656 = vunpack.c.h.b16 %v337
        %v657 = vunpack.c.l.b16 %v338
        %v658 = vunpack.c.h.b16 %v338
        %v659 = vunpack.c.l.b16 %v339
        %v660 = vunpack.c.h.b16 %v339
        %v661 = vunpack.c.l.b16 %v340
        %v662 = vunpack.c.h.b16 %v340
        %v663 = vunpack.c.l.b16 %v341
        %v664 = vunpack.c.h.b16 %v341
        %v665 = vunpack.c.l.b16 %v342
        %v666 = vunpack.c.h.b16 %v342
        %v667 = vunpack.c.l.b16 %v343
        %v668 = vunpack.c.h.b16 %v343
        %v669 = vunpack.c.l.b16 %v344
        %v670 = vunpack.c.h.b16 %v344
        %v671 = vunpack.c.l.b16 %v345
        %v672 = vunpack.c.h.b16 %v345
        %v673 = vunpack.c.l.b16 %v346
        %v674 = vunpack.c.h.b16 %v346
        %v675 = vunpack.c.l.b16 %v347
        %v676 = vunpack.c.h.b16 %v347
        %v677 = vunpack.c.l.b16 %v348
        %v678 = vunpack.c.h.b16 %v348
        %v679 = vunpack.c.l.b16 %v349
        %v680 = vunpack.c.h.b16 %v349
        %v681 = vunpack.c.l.b16 %v350
        %v682 = vunpack.c.h.b16 %v350
        %v683 = vunpack.c.l.b16 %v351
        %v684 = vunpack.c.h.b16 %v351
        %v685 = vunpack.c.l.b16 %v352
        %v686 = vunpack.c.h.b16 %v352
        %v687 = vunpack.c.l.b16 %v353
        %v688 = vunpack.c.h.b16 %v353
        %v689 = vunpack.c.l.b16 %v354
        %v690 = vunpack.c.h.b16 %v354
        %v691 = vunpack.c.l.b16 %v355
        %v692 = vunpack.c.h.b16 %v355
        %v693 = vunpack.c.l.b16 %v356
        %v694 = vunpack.c.h.b16 %v356
        %v695 = vunpack.c.l.b16 %v357
        %v696 = vunpack.c.h.b16 %v357
        %v697 = vunpack.c.l.b16 %v358
        %v698 = vunpack.c.h.b16 %v358
        %v699 = vunpack.c.l.b16 %v359
        %v700 = vunpack.c.h.b16 %v359
        %v701 = vunpack.c.l.b16 %v360
        %v702 = vunpack.c.h.b16 %v360
        %v703 = vunpack.c.l.b16 %v361
        %v704 = vunpack.c.h.b16 %v361
        %v705 = vunpack.c.l.b16 %v362
        %v706 = vunpack.c.h.b16 %v362
        %v707 = vunpack.c.l.b16 %v363
        %v708 = vunpack.c.h.b16 %v363
        %v709 = vunpack.c.l.b16 %v364
        %v710 = vunpack.c.h.b16 %v364
        %v711 = vunpack.c.l.b16 %v365
        %v712 = vunpack.c.h.b16 %v365
        %v713 = vunpack.c.l.b16 %v366
        %v714 = vunpack.c.h.b16 %v366
        %v715 = vunpack.c.l.b16 %v367
        %v716 = vunpack.c.h.b16 %v367
        %v717 = vunpack.c.l.b16 %v368
        %v718 = vunpack.c.h.b16 %v368
        %v719 = vunpack.c.l.b16 %v369
        %v720 = vunpack.c.h.b16 %v369
        %v721 = vunpack.c.l.b16 %v370
        %v722 = vunpack.c.h.b16 %v370
        %v723 = vunpack.c.l.b16 %v371
        %v724 = vunpack.c.h.b16 %v371
        %v725 = vunpack.c.l.b16 %v372
        %v726 = vunpack.c.h.b16 %v372
        %v727 = vunpack.c.l.b16 %v373
        %v728 = vunpack.c.h.b16 %v373
        %v729 = vunpack.c.l.b16 %v374
        %v730 = vunpack.c.h.b16 %v374
        %v731 = vunpack.c.l.b16 %v375
        %v732 = vunpack.c.h.b16 %v375
        %v733 = vunpack.c.l.b16 %v376
        %v734 = vunpack.c.h.b16 %v376
        %v735 = vunpack.c.l.b16 %v377
        %v736 = vunpack.c.h.b16 %v377
        %v737 = vunpack.c.l.b16 %v378
        %v738 = vunpack.c.h.b16 %v378
        %v739 = vunpack.c.l.b16 %v379
        %v740 = vunpack.c.h.b16 %v379
        %v741 = vunpack.c.l.b16 %v380
        %v742 = vunpack.c.h.b16 %v380
        %v743 = vunpack.c.l.b16 %v381
        %v744 = vunpack.c.h.b16 %v381
        %v745 = vunpack.c.l.b16 %v382
        %v746 = vunpack.c.h.b16 %v382
        %v747 = vunpack.c.l.b16 %v383
        %v748 = vunpack.c.h.b16 %v383
        %v749 = vunpack.c.l.b16 %v384
        %v750 = vunpack.c.h.b16 %v384
        %v751 = vunpack.c.l.b16 %v385
        %v752 = vunpack.c.h.b16 %v385
        %v753 = vunpack.c.l.b16 %v386
        %v754 = vunpack.c.h.b16 %v386
        %v755 = vunpack.c.l.b16 %v387
        %v756 = vunpack.c.h.b16 %v387
        %v757 = vunpack.c.l.b16 %v388
        %v758 = vunpack.c.h.b16 %v388
        %v759 = vunpack.c.l.b16 %v389
        %v760 = vunpack.c.h.b16 %v389
        %v761 = vunpack.c.l.b16 %v390
        %v762 = vunpack.c.h.b16 %v390
        %v763 = vunpack.c.l.b16 %v391
        %v764 = vunpack.c.h.b16 %v391
        %v765 = vunpack.c.l.b16 %v392
        %v766 = vunpack.c.h.b16 %v392
        %v767 = vunpack.c.l.b16 %v393
        %v768 = vunpack.c.h.b16 %v393
        %v769 = vunpack.c.l.b16 %v394
        %v770 = vunpack.c.h.b16 %v394
        %v771 = vunpack.c.l.b16 %v395
        %v772 = vunpack.c.h.b16 %v395
        %v773 = vunpack.c.l.b16 %v396
        %v774 = vunpack.c.h.b16 %v396
        %v775 = vunpack.c.l.b16 %v397
        %v776 = vunpack.c.h.b16 %v397
        %v777 = vunpack.c.l.b16 %v398
        %v778 = vunpack.c.h.b16 %v398
        %v779 = vunpack.c.l.b16 %v399
        %v780 = vunpack.c.h.b16 %v399
        %v781 = vunpack.c.l.b16 %v400
        %v782 = vunpack.c.h.b16 %v400
        %v783 = vunpack.c.l.b16 %v401
        %v784 = vunpack.c.h.b16 %v401
        %v785 = vunpack.c.l.b16 %v402
        %v786 = vunpack.c.h.b16 %v402
        %v787 = vunpack.c.l.b16 %v403
        %v788 = vunpack.c.h.b16 %v403
        %v789 = vunpack.c.l.b16 %v404
        %v790 = vunpack.c.h.b16 %v404
        %v791 = vunpack.c.l.b16 %v405
        %v792 = vunpack.c.h.b16 %v405
        %v793 = vunpack.c.l.b16 %v406
        %v794 = vunpack.c.h.b16 %v406
        %v795 = vunpack.c.l.b16 %v407
        %v796 = vunpack.c.h.b16 %v407
        %v797 = vunpack.c.l.b16 %v408
        %v798 = vunpack.c.h.b16 %v408
        %v799 = vunpack.c.l.b16 %v409
        %v800 = vunpack.c.h.b16 %v409
        %v801 = vunpack.c.l.b16 %v410
        %v802 = vunpack.c.h.b16 %v410
        %v803 = vunpack.c.l.b16 %v411
        %v804 = vunpack.c.h.b16 %v411
        %v805 = vunpack.c.l.b16 %v412
        %v806 = vunpack.c.h.b16 %v412
        %v807 = vunpack.c.l.b16 %v413
        %v808 = vunpack.c.h.b16 %v413
        %v809 = vunpack.c.l.b16 %v414
        %v810 = vunpack.c.h.b16 %v414
        %v811 = vunpack.c.l.b16 %v415
        %v812 = vunpack.c.h.b16 %v415
        %v813 = vunpack.c.l.b16 %v416
        %v814 = vunpack.c.h.b16 %v416
        %v815 = vunpack.c.l.b16 %v417
        %v816 = vunpack.c.h.b16 %v417
        %v817 = vunpack.c.l.b16 %v418
        %v818 = vunpack.c.h.b16 %v418
        %v819 = vunpack.c.l.b16 %v419
        %v820 = vunpack.c.h.b16 %v419
        %v821 = vunpack.c.l.b16 %v420
        %v822 = vunpack.c.h.b16 %v420
        %v823 = vunpack.c.l.b16 %v421
        %v824 = vunpack.c.h.b16 %v421
        %v825 = vunpack.c.l.b16 %v422
        %v826 = vunpack.c.h.b16 %v422
        %v827 = vunpack.c.l.b16 %v423
        %v828 = vunpack.c.h.b16 %v423
        %v829 = vunpack.c.l.b16 %v424
        %v830 = vunpack.c.h.b16 %v424
        %v831 = vunpack.c.l.b16 %v425
        %v832 = vunpack.c.h.b16 %v425
        %v833 = vunpack.c.l.b16 %v426
        %v834 = vunpack.c.h.b16 %v426
        %v835 = vunpack.c.l.b16 %v427
        %v836 = vunpack.c.h.b16 %v427
        %v837 = vunpack.c.l.b16 %v428
        %v838 = vunpack.c.h.b16 %v428
        %v839 = vunpack.c.l.b16 %v429
        %v840 = vunpack.c.h.b16 %v429
        %v841 = vunpack.c.l.b16 %v430
        %v842 = vunpack.c.h.b16 %v430
        %v843 = vunpack.c.l.b16 %v431
        %v844 = vunpack.c.h.b16 %v431
        %v845 = vunpack.c.l.b16 %v432
        %v846 = vunpack.c.h.b16 %v432
        %v847 = vunpack.c.l.b16 %v433
        %v848 = vunpack.c.h.b16 %v433
        %v849 = vunpack.c.l.b16 %v434
        %v850 = vunpack.c.h.b16 %v434
        %v851 = vunpack.c.l.b16 %v435
        %v852 = vunpack.c.h.b16 %v435
        %v853 = vunpack.c.l.b16 %v436
        %v854 = vunpack.c.h.b16 %v436
        %v855 = vunpack.c.l.b16 %v437
        %v856 = vunpack.c.h.b16 %v437
        %v857 = vunpack.c.l.b16 %v438
        %v858 = vunpack.c.h.b16 %v438
        %v859 = vunpack.c.l.b16 %v439
        %v860 = vunpack.c.h.b16 %v439
        %v861 = vunpack.c.l.b16 %v440
        %v862 = vunpack.c.h.b16 %v440
        %v863 = vunpack.c.l.b16 %v441
        %v864 = vunpack.c.h.b16 %v441
        %v865 = vunpack.c.l.b16 %v442
        %v866 = vunpack.c.h.b16 %v442
        %v867 = vunpack.c.l.b16 %v443
        %v868 = vunpack.c.h.b16 %v443
        %v869 = vunpack.c.l.b16 %v444
        %v870 = vunpack.c.h.b16 %v444
        %v871 = vunpack.c.l.b16 %v445
        %v872 = vunpack.c.h.b16 %v445
        %v873 = vunpack.c.l.b16 %v446
        %v874 = vunpack.c.h.b16 %v446
        %v875 = vpack.c.b16 %v627, %v619
        %v876 = vpack.c.b16 %v628, %v620
        %v877 = vpack.c.b16 %v629, %v621
        %v878 = vpack.c.b16 %v630, %v622
        %v879 = vpack.c.b16 %v631, %v623
        %v880 = vpack.c.b16 %v632, %v624
        %v881 = vpack.c.b16 %v633, %v625
        %v882 = vpack.c.b16 %v634, %v626
        %v883 = vpack.c.b16 %v643, %v635
        %v884 = vpack.c.b16 %v644, %v636
        %v885 = vpack.c.b16 %v645, %v637
        %v886 = vpack.c.b16 %v646, %v638
        %v887 = vpack.c.b16 %v647, %v639
        %v888 = vpack.c.b16 %v648, %v640
        %v889 = vpack.c.b16 %v649, %v641
        %v890 = vpack.c.b16 %v650, %v642
        %v891 = vpack.c.b16 %v659, %v651
        %v892 = vpack.c.b16 %v660, %v652
        %v893 = vpack.c.b16 %v661, %v653
        %v894 = vpack.c.b16 %v662, %v654
        %v895 = vpack.c.b16 %v663, %v655
        %v896 = vpack.c.b16 %v664, %v656
        %v897 = vpack.c.b16 %v665, %v657
        %v898 = vpack.c.b16 %v666, %v658
        %v899 = vpack.c.b16 %v675, %v667
        %v900 = vpack.c.b16 %v676, %v668
        %v901 = vpack.c.b16 %v677, %v669
        %v902 = vpack.c.b16 %v678, %v670
        %v903 = vpack.c.b16 %v679, %v671
        %v904 = vpack.c.b16 %v680, %v672
        %v905 = vpack.c.b16 %v681, %v673
        %v906 = vpack.c.b16 %v682, %v674
        %v907 = vpack.c.b16 %v691, %v683
        %v908 = vpack.c.b16 %v692, %v684
        %v909 = vpack.c.b16 %v693, %v685
        %v910 = vpack.c.b16 %v694, %v686
        %v911 = vpack.c.b16 %v695, %v687
        %v912 = vpack.c.b16 %v696, %v688
        %v913 = vpack.c.b16 %v697, %v689
        %v914 = vpack.c.b16 %v698, %v690
        %v915 = vpack.c.b16 %v707, %v699
        %v916 = vpack.c.b16 %v708, %v700
        %v917 = vpack.c.b16 %v709, %v701
        %v918 = vpack.c.b16 %v710, %v702
        %v919 = vpack.c.b16 %v711, %v703
        %v920 = vpack.c.b16 %v712, %v704
        %v921 = vpack.c.b16 %v713, %v705
        %v922 = vpack.c.b16 %v714, %v706
        %v923 = vpack.c.b16 %v723, %v715
        %v924 = vpack.c.b16 %v724, %v716
        %v925 = vpack.c.b16 %v725, %v717
        %v926 = vpack.c.b16 %v726, %v718
        %v927 = vpack.c.b16 %v727, %v719
        %v928 = vpack.c.b16 %v728, %v720
        %v929 = vpack.c.b16 %v729, %v721
        %v930 = vpack.c.b16 %v730, %v722
        %v931 = vpack.c.b16 %v739, %v731
        %v932 = vpack.c.b16 %v740, %v732
        %v933 = vpack.c.b16 %v741, %v733
        %v934 = vpack.c.b16 %v742, %v734
        %v935 = vpack.c.b16 %v743, %v735
        %v936 = vpack.c.b16 %v744, %v736
        %v937 = vpack.c.b16 %v745, %v737
        %v938 = vpack.c.b16 %v746, %v738
        %v939 = vpack.c.b16 %v755, %v747
        %v940 = vpack.c.b16 %v756, %v748
        %v941 = vpack.c.b16 %v757, %v749
        %v942 = vpack.c.b16 %v758, %v750
        %v943 = vpack.c.b16 %v759, %v751
        %v944 = vpack.c.b16 %v760, %v752
        %v945 = vpack.c.b16 %v761, %v753
        %v946 = vpack.c.b16 %v762, %v754
        %v947 = vpack.c.b16 %v771, %v763
        %v948 = vpack.c.b16 %v772, %v764
        %v949 = vpack.c.b16 %v773, %v765
        %v950 = vpack.c.b16 %v774, %v766
        %v951 = vpack.c.b16 %v775, %v767
        %v952 = vpack.c.b16 %v776, %v768
        %v953 = vpack.c.b16 %v777, %v769
        %v954 = vpack.c.b16 %v778, %v770
        %v955 = vpack.c.b16 %v787, %v779
        %v956 = vpack.c.b16 %v788, %v780
        %v957 = vpack.c.b16 %v789, %v781
        %v958 = vpack.c.b16 %v790, %v782
        %v959 = vpack.c.b16 %v791, %v783
        %v960 = vpack.c.b16 %v792, %v784
        %v961 = vpack.c.b16 %v793, %v785
        %v962 = vpack.c.b16 %v794, %v786
        %v963 = vpack.c.b16 %v803, %v795
        %v964 = vpack.c.b16 %v804, %v796
        %v965 = vpack.c.b16 %v805, %v797
        %v966 = vpack.c.b16 %v806, %v798
        %v967 = vpack.c.b16 %v807, %v799
        %v968 = vpack.c.b16 %v808, %v800
        %v969 = vpack.c.b16 %v809, %v801
        %v970 = vpack.c.b16 %v810, %v802
        %v971 = vpack.c.b16 %v819, %v811
        %v972 = vpack.c.b16 %v820, %v812
        %v973 = vpack.c.b16 %v821, %v813
        %v974 = vpack.c.b16 %v822, %v814
        %v975 = vpack.c.b16 %v823, %v815
        %v976 = vpack.c.b16 %v824, %v816
        %v977 = vpack.c.b16 %v825, %v817
        %v978 = vpack.c.b16 %v826, %v818
        %v979 = vpack.c.b16 %v835, %v827
        %v980 = vpack.c.b16 %v836, %v828
        %v981 = vpack.c.b16 %v837, %v829
        %v982 = vpack.c.b16 %v838, %v830
        %v983 = vpack.c.b16 %v839, %v831
        %v984 = vpack.c.b16 %v840, %v832
        %v985 = vpack.c.b16 %v841, %v833
        %v986 = vpack.c.b16 %v842, %v834
        %v987 = vpack.c.b16 %v851, %v843
        %v988 = vpack.c.b16 %v852, %v844
        %v989 = vpack.c.b16 %v853, %v845
        %v990 = vpack.c.b16 %v854, %v846
        %v991 = vpack.c.b16 %v855, %v847
        %v992 = vpack.c.b16 %v856, %v848
        %v993 = vpack.c.b16 %v857, %v849
        %v994 = vpack.c.b16 %v858, %v850
        %v995 = vpack.c.b16 %v867, %v859
        %v996 = vpack.c.b16 %v868, %v860
        %v997 = vpack.c.b16 %v869, %v861
        %v998 = vpack.c.b16 %v870, %v862
        %v999 = vpack.c.b16 %v871, %v863
        %v1000 = vpack.c.b16 %v872, %v864
        %v1001 = vpack.c.b16 %v873, %v865
        %v1002 = vpack.c.b16 %v874, %v866
        %1131 = vmatprep.subr.bf16.mxu0 %v876
        %1132 = vmatpush1.bf16.msra.mxu0 %v875
        %1133 = vmatprep.subr.bf16.mxu0 %v884
        %1134 = vmatpush1.bf16.msra.mxu0 %v883
        %1135 = vmatprep.subr.bf16.mxu0 %v892
        %1136 = vmatpush1.bf16.msra.mxu0 %v891
        %1137 = vmatprep.subr.bf16.mxu0 %v900
        %1138 = vmatpush1.bf16.msra.mxu0 %v899
        %1139 = vmatprep.subr.bf16.mxu0 %v908
        %1140 = vmatpush1.bf16.msra.mxu0 %v907
        %1141 = vmatprep.subr.bf16.mxu0 %v916
        %1142 = vmatpush1.bf16.msra.mxu0 %v915
        %1143 = vmatprep.subr.bf16.mxu0 %v924
        %1144 = vmatpush1.bf16.msra.mxu0 %v923
        %1145 = vmatprep.subr.bf16.mxu0 %v932
        %1146 = vmatpush1.bf16.msra.mxu0 %v931
        %1147 = vmatprep.subr.bf16.mxu0 %v940
        %1148 = vmatpush1.bf16.msra.mxu0 %v939
        %1149 = vmatprep.subr.bf16.mxu0 %v948
        %1150 = vmatpush1.bf16.msra.mxu0 %v947
        %1151 = vmatprep.subr.bf16.mxu0 %v956
        %1152 = vmatpush1.bf16.msra.mxu0 %v955
        %1153 = vmatprep.subr.bf16.mxu0 %v964
        %1154 = vmatpush1.bf16.msra.mxu0 %v963
        %1155 = vmatprep.subr.bf16.mxu0 %v972
        %1156 = vmatpush1.bf16.msra.mxu0 %v971
        %1157 = vmatprep.subr.bf16.mxu0 %v980
        %1158 = vmatpush1.bf16.msra.mxu0 %v979
        %1159 = vmatprep.subr.bf16.mxu0 %v988
        %1160 = vmatpush1.bf16.msra.mxu0 %v987
        %1161 = vmatprep.subr.bf16.mxu0 %v996
        %1162 = vmatpush1.bf16.msra.mxu0 %v995
        %1163 = vmatprep.mubr.bf16.mxu0 %v318
        %1164 = vmatmul.mubr.bf16.gmra.mrb[0].mxu0 %v317
        %v1165 = vpop.f32.mrb[0].mxu0
        %v1166 = vadd.f32 %v462, %v1165
        %v1167 = vpop.f32.mrb[0].mxu0
        %v1168 = vadd.f32 %v466, %v1167
        %v1169 = vpop.f32.mrb[0].mxu0
        %v1170 = vpop.f32.mrb[0].mxu0
        %1171 = vdwg.mxu0
        %1172 = vmatprep.subr.bf16.mxu0 %v878
        %1173 = vmatpush1.bf16.msra.mxu0 %v877
        %1174 = vmatprep.subr.bf16.mxu0 %v886
        %1175 = vmatpush1.bf16.msra.mxu0 %v885
        %1176 = vmatprep.subr.bf16.mxu0 %v894
        %1177 = vmatpush1.bf16.msra.mxu0 %v893
        %1178 = vmatprep.subr.bf16.mxu0 %v902
        %1179 = vmatpush1.bf16.msra.mxu0 %v901
        %1180 = vmatprep.subr.bf16.mxu0 %v910
        %1181 = vmatpush1.bf16.msra.mxu0 %v909
        %1182 = vmatprep.subr.bf16.mxu0 %v918
        %1183 = vmatpush1.bf16.msra.mxu0 %v917
        %1184 = vmatprep.subr.bf16.mxu0 %v926
        %1185 = vmatpush1.bf16.msra.mxu0 %v925
        %1186 = vmatprep.subr.bf16.mxu0 %v934
        %1187 = vmatpush1.bf16.msra.mxu0 %v933
        %1188 = vmatprep.subr.bf16.mxu0 %v942
        %1189 = vmatpush1.bf16.msra.mxu0 %v941
        %1190 = vmatprep.subr.bf16.mxu0 %v950
        %1191 = vmatpush1.bf16.msra.mxu0 %v949
        %1192 = vmatprep.subr.bf16.mxu0 %v958
        %1193 = vmatpush1.bf16.msra.mxu0 %v957
        %1194 = vmatprep.subr.bf16.mxu0 %v966
        %1195 = vmatpush1.bf16.msra.mxu0 %v965
        %1196 = vmatprep.subr.bf16.mxu0 %v974
        %1197 = vmatpush1.bf16.msra.mxu0 %v973
        %1198 = vmatprep.subr.bf16.mxu0 %v982
        %1199 = vmatpush1.bf16.msra.mxu0 %v981
        %1200 = vmatprep.subr.bf16.mxu0 %v990
        %1201 = vmatpush1.bf16.msra.mxu0 %v989
        %1202 = vmatprep.subr.bf16.mxu0 %v998
        %1203 = vmatpush1.bf16.msra.mxu0 %v997
        %1204 = vmatprep.mubr.bf16.mxu0 %v318
        %1205 = vmatmul.mubr.bf16.gmra.mrb[0].mxu0 %v317
        %v1206 = vpop.f32.mrb[0].mxu0
        %v1207 = vadd.f32 %v470, %v1206
        %v1208 = vpop.f32.mrb[0].mxu0
        %v1209 = vadd.f32 %v474, %v1208
        %v1210 = vpop.f32.mrb[0].mxu0
        %v1211 = vpop.f32.mrb[0].mxu0
        %1212 = vdwg.mxu0
        %1213 = vmatprep.subr.bf16.mxu0 %v880
        %1214 = vmatpush1.bf16.msra.mxu0 %v879
        %1215 = vmatprep.subr.bf16.mxu0 %v888
        %1216 = vmatpush1.bf16.msra.mxu0 %v887
        %1217 = vmatprep.subr.bf16.mxu0 %v896
        %1218 = vmatpush1.bf16.msra.mxu0 %v895
        %1219 = vmatprep.subr.bf16.mxu0 %v904
        %1220 = vmatpush1.bf16.msra.mxu0 %v903
        %1221 = vmatprep.subr.bf16.mxu0 %v912
        %1222 = vmatpush1.bf16.msra.mxu0 %v911
        %1223 = vmatprep.subr.bf16.mxu0 %v920
        %1224 = vmatpush1.bf16.msra.mxu0 %v919
        %1225 = vmatprep.subr.bf16.mxu0 %v928
        %1226 = vmatpush1.bf16.msra.mxu0 %v927
        %1227 = vmatprep.subr.bf16.mxu0 %v936
        %1228 = vmatpush1.bf16.msra.mxu0 %v935
        %1229 = vmatprep.subr.bf16.mxu0 %v944
        %1230 = vmatpush1.bf16.msra.mxu0 %v943
        %1231 = vmatprep.subr.bf16.mxu0 %v952
        %1232 = vmatpush1.bf16.msra.mxu0 %v951
        %1233 = vmatprep.subr.bf16.mxu0 %v960
        %1234 = vmatpush1.bf16.msra.mxu0 %v959
        %1235 = vmatprep.subr.bf16.mxu0 %v968
        %1236 = vmatpush1.bf16.msra.mxu0 %v967
        %1237 = vmatprep.subr.bf16.mxu0 %v976
        %1238 = vmatpush1.bf16.msra.mxu0 %v975
        %1239 = vmatprep.subr.bf16.mxu0 %v984
        %1240 = vmatpush1.bf16.msra.mxu0 %v983
        %1241 = vmatprep.subr.bf16.mxu0 %v992
        %1242 = vmatpush1.bf16.msra.mxu0 %v991
        %1243 = vmatprep.subr.bf16.mxu0 %v1000
        %1244 = vmatpush1.bf16.msra.mxu0 %v999
        %1245 = vmatprep.mubr.bf16.mxu0 %v318
        %1246 = vmatmul.mubr.bf16.gmra.mrb[0].mxu0 %v317
        %v1247 = vpop.f32.mrb[0].mxu0
        %v1248 = vadd.f32 %v478, %v1247
        %v1249 = vpop.f32.mrb[0].mxu0
        %v1250 = vadd.f32 %v482, %v1249
        %v1251 = vpop.f32.mrb[0].mxu0
        %v1252 = vpop.f32.mrb[0].mxu0
        %1253 = vdwg.mxu0
        %1254 = vmatprep.subr.bf16.mxu0 %v882
        %1255 = vmatpush1.bf16.msra.mxu0 %v881
        %1256 = vmatprep.subr.bf16.mxu0 %v890
        %1257 = vmatpush1.bf16.msra.mxu0 %v889
        %1258 = vmatprep.subr.bf16.mxu0 %v898
        %1259 = vmatpush1.bf16.msra.mxu0 %v897
        %1260 = vmatprep.subr.bf16.mxu0 %v906
        %1261 = vmatpush1.bf16.msra.mxu0 %v905
        %1262 = vmatprep.subr.bf16.mxu0 %v914
        %1263 = vmatpush1.bf16.msra.mxu0 %v913
        %1264 = vmatprep.subr.bf16.mxu0 %v922
        %1265 = vmatpush1.bf16.msra.mxu0 %v921
        %1266 = vmatprep.subr.bf16.mxu0 %v930
        %1267 = vmatpush1.bf16.msra.mxu0 %v929
        %1268 = vmatprep.subr.bf16.mxu0 %v938
        %1269 = vmatpush1.bf16.msra.mxu0 %v937
        %1270 = vmatprep.subr.bf16.mxu0 %v946
        %1271 = vmatpush1.bf16.msra.mxu0 %v945
        %1272 = vmatprep.subr.bf16.mxu0 %v954
        %1273 = vmatpush1.bf16.msra.mxu0 %v953
        %1274 = vmatprep.subr.bf16.mxu0 %v962
        %1275 = vmatpush1.bf16.msra.mxu0 %v961
        %1276 = vmatprep.subr.bf16.mxu0 %v970
        %1277 = vmatpush1.bf16.msra.mxu0 %v969
        %1278 = vmatprep.subr.bf16.mxu0 %v978
        %1279 = vmatpush1.bf16.msra.mxu0 %v977
        %1280 = vmatprep.subr.bf16.mxu0 %v986
        %1281 = vmatpush1.bf16.msra.mxu0 %v985
        %1282 = vmatprep.subr.bf16.mxu0 %v994
        %1283 = vmatpush1.bf16.msra.mxu0 %v993
        %1284 = vmatprep.subr.bf16.mxu0 %v1002
        %1285 = vmatpush1.bf16.msra.mxu0 %v1001
        %1286 = vmatprep.mubr.bf16.mxu0 %v318
        %1287 = vmatmul.mubr.bf16.gmra.mrb[0].mxu0 %v317
        %v1288 = vpop.f32.mrb[0].mxu0
        %v1289 = vadd.f32 %v486, %v1288
        %v1290 = vpop.f32.mrb[0].mxu0
        %v1291 = vadd.f32 %v490, %v1290
        %v1292 = vpop.f32.mrb[0].mxu0
        %v1293 = vpop.f32.mrb[0].mxu0
        %1294 = vdwg.mxu0
        %v1295 = vmax.f32 %v1166, 0.0
        %v1296 = vmax.f32 %v1168, 0.0
        %v1297 = vmax.f32 %v1207, 0.0
        %v1298 = vmax.f32 %v1209, 0.0
        %v1299 = vmax.f32 %v1248, 0.0
        %v1300 = vmax.f32 %v1250, 0.0
        %v1301 = vmax.f32 %v1289, 0.0
        %v1302 = vmax.f32 %v1291, 0.0
        %v1303 = vpack.c.bf16 %v1295, %v1295
        %v1304 = vpack.c.bf16 %v1296, %v1296
        %v1305 = vpack.c.bf16 %v1297, %v1297
        %v1306 = vpack.c.bf16 %v1298, %v1298
        %v1307 = vpack.c.bf16 %v1299, %v1299
        %v1308 = vpack.c.bf16 %v1300, %v1300
        %v1309 = vpack.c.bf16 %v1301, %v1301
        %v1310 = vpack.c.bf16 %v1302, %v1302
        %v1311 = vld [vmem:[%s3] sm:$0xf]
        %v1312 = vld [vmem:[%s3 + $0x4] sm:$0xf]
        %v1313 = vld [vmem:[%s3 + $0x8] sm:$0xf]
        %v1314 = vld [vmem:[%s3 + $0xc] sm:$0xf]
        %v1315 = vld [vmem:[%s3 + $0x10] sm:$0xf]
        %v1316 = vld [vmem:[%s3 + $0x14] sm:$0xf]
        %v1317 = vld [vmem:[%s3 + $0x18] sm:$0xf]
        %v1318 = vld [vmem:[%s3 + $0x1c] sm:$0xf]
        %v1319 = vld [vmem:[%s3 + $0x20] sm:$0xf]
        %v1320 = vld [vmem:[%s3 + $0x24] sm:$0xf]
        %v1321 = vld [vmem:[%s3 + $0x28] sm:$0xf]
        %v1322 = vld [vmem:[%s3 + $0x2c] sm:$0xf]
        %v1323 = vld [vmem:[%s3 + $0x30] sm:$0xf]
        %v1324 = vld [vmem:[%s3 + $0x34] sm:$0xf]
        %v1325 = vld [vmem:[%s3 + $0x38] sm:$0xf]
        %v1326 = vld [vmem:[%s3 + $0x3c] sm:$0xf]
        %v1327 = vld [vmem:[%s3 + $0x40] sm:$0xf]
        %v1328 = vld [vmem:[%s3 + $0x44] sm:$0xf]
        %v1329 = vld [vmem:[%s3 + $0x48] sm:$0xf]
        %v1330 = vld [vmem:[%s3 + $0x4c] sm:$0xf]
        %v1331 = vld [vmem:[%s3 + $0x50] sm:$0xf]
        %v1332 = vld [vmem:[%s3 + $0x54] sm:$0xf]
        %v1333 = vld [vmem:[%s3 + $0x58] sm:$0xf]
        %v1334 = vld [vmem:[%s3 + $0x5c] sm:$0xf]
        %v1335 = vld [vmem:[%s3 + $0x60] sm:$0xf]
        %v1336 = vld [vmem:[%s3 + $0x64] sm:$0xf]
        %v1337 = vld [vmem:[%s3 + $0x68] sm:$0xf]
        %v1338 = vld [vmem:[%s3 + $0x6c] sm:$0xf]
        %v1339 = vld [vmem:[%s3 + $0x70] sm:$0xf]
        %v1340 = vld [vmem:[%s3 + $0x74] sm:$0xf]
        %v1341 = vld [vmem:[%s3 + $0x78] sm:$0xf]
        %v1342 = vld [vmem:[%s3 + $0x7c] sm:$0xf]
        %v1343 = vld [vmem:[%s3 + $0x80] sm:$0xf]
        %v1344 = vld [vmem:[%s3 + $0x84] sm:$0xf]
        %v1345 = vld [vmem:[%s3 + $0x88] sm:$0xf]
        %v1346 = vld [vmem:[%s3 + $0x8c] sm:$0xf]
        %v1347 = vld [vmem:[%s3 + $0x90] sm:$0xf]
        %v1348 = vld [vmem:[%s3 + $0x94] sm:$0xf]
        %v1349 = vld [vmem:[%s3 + $0x98] sm:$0xf]
        %v1350 = vld [vmem:[%s3 + $0x9c] sm:$0xf]
        %v1351 = vld [vmem:[%s3 + $0xa0] sm:$0xf]
        %v1352 = vld [vmem:[%s3 + $0xa4] sm:$0xf]
        %v1353 = vld [vmem:[%s3 + $0xa8] sm:$0xf]
        %v1354 = vld [vmem:[%s3 + $0xac] sm:$0xf]
        %v1355 = vld [vmem:[%s3 + $0xb0] sm:$0xf]
        %v1356 = vld [vmem:[%s3 + $0xb4] sm:$0xf]
        %v1357 = vld [vmem:[%s3 + $0xb8] sm:$0xf]
        %v1358 = vld [vmem:[%s3 + $0xbc] sm:$0xf]
        %v1359 = vld [vmem:[%s3 + $0xc0] sm:$0xf]
        %v1360 = vld [vmem:[%s3 + $0xc4] sm:$0xf]
        %v1361 = vld [vmem:[%s3 + $0xc8] sm:$0xf]
        %v1362 = vld [vmem:[%s3 + $0xcc] sm:$0xf]
        %v1363 = vld [vmem:[%s3 + $0xd0] sm:$0xf]
        %v1364 = vld [vmem:[%s3 + $0xd4] sm:$0xf]
        %v1365 = vld [vmem:[%s3 + $0xd8] sm:$0xf]
        %v1366 = vld [vmem:[%s3 + $0xdc] sm:$0xf]
        %v1367 = vld [vmem:[%s3 + $0xe0] sm:$0xf]
        %v1368 = vld [vmem:[%s3 + $0xe4] sm:$0xf]
        %v1369 = vld [vmem:[%s3 + $0xe8] sm:$0xf]
        %v1370 = vld [vmem:[%s3 + $0xec] sm:$0xf]
        %v1371 = vld [vmem:[%s3 + $0xf0] sm:$0xf]
        %v1372 = vld [vmem:[%s3 + $0xf4] sm:$0xf]
        %v1373 = vld [vmem:[%s3 + $0xf8] sm:$0xf]
        %v1374 = vld [vmem:[%s3 + $0xfc] sm:$0xf]
        %v1375 = vld [vmem:[%s3 + $0x100] sm:$0xf]
        %v1376 = vld [vmem:[%s3 + $0x104] sm:$0xf]
        %v1377 = vld [vmem:[%s3 + $0x108] sm:$0xf]
        %v1378 = vld [vmem:[%s3 + $0x10c] sm:$0xf]
        %v1379 = vld [vmem:[%s3 + $0x110] sm:$0xf]
        %v1380 = vld [vmem:[%s3 + $0x114] sm:$0xf]
        %v1381 = vld [vmem:[%s3 + $0x118] sm:$0xf]
        %v1382 = vld [vmem:[%s3 + $0x11c] sm:$0xf]
        %v1383 = vld [vmem:[%s3 + $0x120] sm:$0xf]
        %v1384 = vld [vmem:[%s3 + $0x124] sm:$0xf]
        %v1385 = vld [vmem:[%s3 + $0x128] sm:$0xf]
        %v1386 = vld [vmem:[%s3 + $0x12c] sm:$0xf]
        %v1387 = vld [vmem:[%s3 + $0x130] sm:$0xf]
        %v1388 = vld [vmem:[%s3 + $0x134] sm:$0xf]
        %v1389 = vld [vmem:[%s3 + $0x138] sm:$0xf]
        %v1390 = vld [vmem:[%s3 + $0x13c] sm:$0xf]
        %v1391 = vld [vmem:[%s3 + $0x140] sm:$0xf]
        %v1392 = vld [vmem:[%s3 + $0x144] sm:$0xf]
        %v1393 = vld [vmem:[%s3 + $0x148] sm:$0xf]
        %v1394 = vld [vmem:[%s3 + $0x14c] sm:$0xf]
        %v1395 = vld [vmem:[%s3 + $0x150] sm:$0xf]
        %v1396 = vld [vmem:[%s3 + $0x154] sm:$0xf]
        %v1397 = vld [vmem:[%s3 + $0x158] sm:$0xf]
        %v1398 = vld [vmem:[%s3 + $0x15c] sm:$0xf]
        %v1399 = vld [vmem:[%s3 + $0x160] sm:$0xf]
        %v1400 = vld [vmem:[%s3 + $0x164] sm:$0xf]
        %v1401 = vld [vmem:[%s3 + $0x168] sm:$0xf]
        %v1402 = vld [vmem:[%s3 + $0x16c] sm:$0xf]
        %v1403 = vld [vmem:[%s3 + $0x170] sm:$0xf]
        %v1404 = vld [vmem:[%s3 + $0x174] sm:$0xf]
        %v1405 = vld [vmem:[%s3 + $0x178] sm:$0xf]
        %v1406 = vld [vmem:[%s3 + $0x17c] sm:$0xf]
        %v1407 = vld [vmem:[%s3 + $0x180] sm:$0xf]
        %v1408 = vld [vmem:[%s3 + $0x184] sm:$0xf]
        %v1409 = vld [vmem:[%s3 + $0x188] sm:$0xf]
        %v1410 = vld [vmem:[%s3 + $0x18c] sm:$0xf]
        %v1411 = vld [vmem:[%s3 + $0x190] sm:$0xf]
        %v1412 = vld [vmem:[%s3 + $0x194] sm:$0xf]
        %v1413 = vld [vmem:[%s3 + $0x198] sm:$0xf]
        %v1414 = vld [vmem:[%s3 + $0x19c] sm:$0xf]
        %v1415 = vld [vmem:[%s3 + $0x1a0] sm:$0xf]
        %v1416 = vld [vmem:[%s3 + $0x1a4] sm:$0xf]
        %v1417 = vld [vmem:[%s3 + $0x1a8] sm:$0xf]
        %v1418 = vld [vmem:[%s3 + $0x1ac] sm:$0xf]
        %v1419 = vld [vmem:[%s3 + $0x1b0] sm:$0xf]
        %v1420 = vld [vmem:[%s3 + $0x1b4] sm:$0xf]
        %v1421 = vld [vmem:[%s3 + $0x1b8] sm:$0xf]
        %v1422 = vld [vmem:[%s3 + $0x1bc] sm:$0xf]
        %v1423 = vld [vmem:[%s3 + $0x1c0] sm:$0xf]
        %v1424 = vld [vmem:[%s3 + $0x1c4] sm:$0xf]
        %v1425 = vld [vmem:[%s3 + $0x1c8] sm:$0xf]
        %v1426 = vld [vmem:[%s3 + $0x1cc] sm:$0xf]
        %v1427 = vld [vmem:[%s3 + $0x1d0] sm:$0xf]
        %v1428 = vld [vmem:[%s3 + $0x1d4] sm:$0xf]
        %v1429 = vld [vmem:[%s3 + $0x1d8] sm:$0xf]
        %v1430 = vld [vmem:[%s3 + $0x1dc] sm:$0xf]
        %v1431 = vld [vmem:[%s3 + $0x1e0] sm:$0xf]
        %v1432 = vld [vmem:[%s3 + $0x1e4] sm:$0xf]
        %v1433 = vld [vmem:[%s3 + $0x1e8] sm:$0xf]
        %v1434 = vld [vmem:[%s3 + $0x1ec] sm:$0xf]
        %v1435 = vld [vmem:[%s3 + $0x1f0] sm:$0xf]
        %v1436 = vld [vmem:[%s3 + $0x1f4] sm:$0xf]
        %v1437 = vld [vmem:[%s3 + $0x1f8] sm:$0xf]
        %v1438 = vld [vmem:[%s3 + $0x1fc] sm:$0xf]
        %v1439 = vld [vmem:[%s3 + $0x200] sm:$0x1]
        %v1440 = vunpack.c.l.bf16 %v1439
        %v1441 = vlaneseq
        %v1442 = vshrl.u32 %v1441, 7
        %v1443 = vsub.s32 0, %v1442
        %v1444 = vrot.slane %v1440, %v1443
        %v1573 = vunpack.c.l.b16 %v1311
        %v1574 = vunpack.c.l.b16 %v1312
        %v1575 = vunpack.c.l.b16 %v1313
        %v1576 = vunpack.c.l.b16 %v1314
        %v1577 = vunpack.c.l.b16 %v1315
        %v1578 = vunpack.c.l.b16 %v1316
        %v1579 = vunpack.c.l.b16 %v1317
        %v1580 = vunpack.c.l.b16 %v1318
        %v1581 = vunpack.c.l.b16 %v1319
        %v1582 = vunpack.c.l.b16 %v1320
        %v1583 = vunpack.c.l.b16 %v1321
        %v1584 = vunpack.c.l.b16 %v1322
        %v1585 = vunpack.c.l.b16 %v1323
        %v1586 = vunpack.c.l.b16 %v1324
        %v1587 = vunpack.c.l.b16 %v1325
        %v1588 = vunpack.c.l.b16 %v1326
        %v1589 = vunpack.c.l.b16 %v1327
        %v1590 = vunpack.c.l.b16 %v1328
        %v1591 = vunpack.c.l.b16 %v1329
        %v1592 = vunpack.c.l.b16 %v1330
        %v1593 = vunpack.c.l.b16 %v1331
        %v1594 = vunpack.c.l.b16 %v1332
        %v1595 = vunpack.c.l.b16 %v1333
        %v1596 = vunpack.c.l.b16 %v1334
        %v1597 = vunpack.c.l.b16 %v1335
        %v1598 = vunpack.c.l.b16 %v1336
        %v1599 = vunpack.c.l.b16 %v1337
        %v1600 = vunpack.c.l.b16 %v1338
        %v1601 = vunpack.c.l.b16 %v1339
        %v1602 = vunpack.c.l.b16 %v1340
        %v1603 = vunpack.c.l.b16 %v1341
        %v1604 = vunpack.c.l.b16 %v1342
        %v1605 = vunpack.c.l.b16 %v1343
        %v1606 = vunpack.c.l.b16 %v1344
        %v1607 = vunpack.c.l.b16 %v1345
        %v1608 = vunpack.c.l.b16 %v1346
        %v1609 = vunpack.c.l.b16 %v1347
        %v1610 = vunpack.c.l.b16 %v1348
        %v1611 = vunpack.c.l.b16 %v1349
        %v1612 = vunpack.c.l.b16 %v1350
        %v1613 = vunpack.c.l.b16 %v1351
        %v1614 = vunpack.c.l.b16 %v1352
        %v1615 = vunpack.c.l.b16 %v1353
        %v1616 = vunpack.c.l.b16 %v1354
        %v1617 = vunpack.c.l.b16 %v1355
        %v1618 = vunpack.c.l.b16 %v1356
        %v1619 = vunpack.c.l.b16 %v1357
        %v1620 = vunpack.c.l.b16 %v1358
        %v1621 = vunpack.c.l.b16 %v1359
        %v1622 = vunpack.c.l.b16 %v1360
        %v1623 = vunpack.c.l.b16 %v1361
        %v1624 = vunpack.c.l.b16 %v1362
        %v1625 = vunpack.c.l.b16 %v1363
        %v1626 = vunpack.c.l.b16 %v1364
        %v1627 = vunpack.c.l.b16 %v1365
        %v1628 = vunpack.c.l.b16 %v1366
        %v1629 = vunpack.c.l.b16 %v1367
        %v1630 = vunpack.c.l.b16 %v1368
        %v1631 = vunpack.c.l.b16 %v1369
        %v1632 = vunpack.c.l.b16 %v1370
        %v1633 = vunpack.c.l.b16 %v1371
        %v1634 = vunpack.c.l.b16 %v1372
        %v1635 = vunpack.c.l.b16 %v1373
        %v1636 = vunpack.c.l.b16 %v1374
        %v1637 = vunpack.c.l.b16 %v1375
        %v1638 = vunpack.c.l.b16 %v1376
        %v1639 = vunpack.c.l.b16 %v1377
        %v1640 = vunpack.c.l.b16 %v1378
        %v1641 = vunpack.c.l.b16 %v1379
        %v1642 = vunpack.c.l.b16 %v1380
        %v1643 = vunpack.c.l.b16 %v1381
        %v1644 = vunpack.c.l.b16 %v1382
        %v1645 = vunpack.c.l.b16 %v1383
        %v1646 = vunpack.c.l.b16 %v1384
        %v1647 = vunpack.c.l.b16 %v1385
        %v1648 = vunpack.c.l.b16 %v1386
        %v1649 = vunpack.c.l.b16 %v1387
        %v1650 = vunpack.c.l.b16 %v1388
        %v1651 = vunpack.c.l.b16 %v1389
        %v1652 = vunpack.c.l.b16 %v1390
        %v1653 = vunpack.c.l.b16 %v1391
        %v1654 = vunpack.c.l.b16 %v1392
        %v1655 = vunpack.c.l.b16 %v1393
        %v1656 = vunpack.c.l.b16 %v1394
        %v1657 = vunpack.c.l.b16 %v1395
        %v1658 = vunpack.c.l.b16 %v1396
        %v1659 = vunpack.c.l.b16 %v1397
        %v1660 = vunpack.c.l.b16 %v1398
        %v1661 = vunpack.c.l.b16 %v1399
        %v1662 = vunpack.c.l.b16 %v1400
        %v1663 = vunpack.c.l.b16 %v1401
        %v1664 = vunpack.c.l.b16 %v1402
        %v1665 = vunpack.c.l.b16 %v1403
        %v1666 = vunpack.c.l.b16 %v1404
        %v1667 = vunpack.c.l.b16 %v1405
        %v1668 = vunpack.c.l.b16 %v1406
        %v1669 = vunpack.c.l.b16 %v1407
        %v1670 = vunpack.c.l.b16 %v1408
        %v1671 = vunpack.c.l.b16 %v1409
        %v1672 = vunpack.c.l.b16 %v1410
        %v1673 = vunpack.c.l.b16 %v1411
        %v1674 = vunpack.c.l.b16 %v1412
        %v1675 = vunpack.c.l.b16 %v1413
        %v1676 = vunpack.c.l.b16 %v1414
        %v1677 = vunpack.c.l.b16 %v1415
        %v1678 = vunpack.c.l.b16 %v1416
        %v1679 = vunpack.c.l.b16 %v1417
        %v1680 = vunpack.c.l.b16 %v1418
        %v1681 = vunpack.c.l.b16 %v1419
        %v1682 = vunpack.c.l.b16 %v1420
        %v1683 = vunpack.c.l.b16 %v1421
        %v1684 = vunpack.c.l.b16 %v1422
        %v1685 = vunpack.c.l.b16 %v1423
        %v1686 = vunpack.c.l.b16 %v1424
        %v1687 = vunpack.c.l.b16 %v1425
        %v1688 = vunpack.c.l.b16 %v1426
        %v1689 = vunpack.c.l.b16 %v1427
        %v1690 = vunpack.c.l.b16 %v1428
        %v1691 = vunpack.c.l.b16 %v1429
        %v1692 = vunpack.c.l.b16 %v1430
        %v1693 = vunpack.c.l.b16 %v1431
        %v1694 = vunpack.c.l.b16 %v1432
        %v1695 = vunpack.c.l.b16 %v1433
        %v1696 = vunpack.c.l.b16 %v1434
        %v1697 = vunpack.c.l.b16 %v1435
        %v1698 = vunpack.c.l.b16 %v1436
        %v1699 = vunpack.c.l.b16 %v1437
        %v1700 = vunpack.c.l.b16 %v1438
        %v1701 = vpack.c.b16 %v1574, %v1573
        %v1702 = vpack.c.b16 %v1576, %v1575
        %v1703 = vpack.c.b16 %v1578, %v1577
        %v1704 = vpack.c.b16 %v1580, %v1579
        %v1705 = vpack.c.b16 %v1582, %v1581
        %v1706 = vpack.c.b16 %v1584, %v1583
        %v1707 = vpack.c.b16 %v1586, %v1585
        %v1708 = vpack.c.b16 %v1588, %v1587
        %v1709 = vpack.c.b16 %v1590, %v1589
        %v1710 = vpack.c.b16 %v1592, %v1591
        %v1711 = vpack.c.b16 %v1594, %v1593
        %v1712 = vpack.c.b16 %v1596, %v1595
        %v1713 = vpack.c.b16 %v1598, %v1597
        %v1714 = vpack.c.b16 %v1600, %v1599
        %v1715 = vpack.c.b16 %v1602, %v1601
        %v1716 = vpack.c.b16 %v1604, %v1603
        %v1717 = vpack.c.b16 %v1606, %v1605
        %v1718 = vpack.c.b16 %v1608, %v1607
        %v1719 = vpack.c.b16 %v1610, %v1609
        %v1720 = vpack.c.b16 %v1612, %v1611
        %v1721 = vpack.c.b16 %v1614, %v1613
        %v1722 = vpack.c.b16 %v1616, %v1615
        %v1723 = vpack.c.b16 %v1618, %v1617
        %v1724 = vpack.c.b16 %v1620, %v1619
        %v1725 = vpack.c.b16 %v1622, %v1621
        %v1726 = vpack.c.b16 %v1624, %v1623
        %v1727 = vpack.c.b16 %v1626, %v1625
        %v1728 = vpack.c.b16 %v1628, %v1627
        %v1729 = vpack.c.b16 %v1630, %v1629
        %v1730 = vpack.c.b16 %v1632, %v1631
        %v1731 = vpack.c.b16 %v1634, %v1633
        %v1732 = vpack.c.b16 %v1636, %v1635
        %v1733 = vpack.c.b16 %v1638, %v1637
        %v1734 = vpack.c.b16 %v1640, %v1639
        %v1735 = vpack.c.b16 %v1642, %v1641
        %v1736 = vpack.c.b16 %v1644, %v1643
        %v1737 = vpack.c.b16 %v1646, %v1645
        %v1738 = vpack.c.b16 %v1648, %v1647
        %v1739 = vpack.c.b16 %v1650, %v1649
        %v1740 = vpack.c.b16 %v1652, %v1651
        %v1741 = vpack.c.b16 %v1654, %v1653
        %v1742 = vpack.c.b16 %v1656, %v1655
        %v1743 = vpack.c.b16 %v1658, %v1657
        %v1744 = vpack.c.b16 %v1660, %v1659
        %v1745 = vpack.c.b16 %v1662, %v1661
        %v1746 = vpack.c.b16 %v1664, %v1663
        %v1747 = vpack.c.b16 %v1666, %v1665
        %v1748 = vpack.c.b16 %v1668, %v1667
        %v1749 = vpack.c.b16 %v1670, %v1669
        %v1750 = vpack.c.b16 %v1672, %v1671
        %v1751 = vpack.c.b16 %v1674, %v1673
        %v1752 = vpack.c.b16 %v1676, %v1675
        %v1753 = vpack.c.b16 %v1678, %v1677
        %v1754 = vpack.c.b16 %v1680, %v1679
        %v1755 = vpack.c.b16 %v1682, %v1681
        %v1756 = vpack.c.b16 %v1684, %v1683
        %v1757 = vpack.c.b16 %v1686, %v1685
        %v1758 = vpack.c.b16 %v1688, %v1687
        %v1759 = vpack.c.b16 %v1690, %v1689
        %v1760 = vpack.c.b16 %v1692, %v1691
        %v1761 = vpack.c.b16 %v1694, %v1693
        %v1762 = vpack.c.b16 %v1696, %v1695
        %v1763 = vpack.c.b16 %v1698, %v1697
        %v1764 = vpack.c.b16 %v1700, %v1699
        %1829 = vmatprep.subr.bf16.mxu0 0
        %1830 = vmatpush1.bf16.msra.mxu0 %v1701
        %1831 = vmatprep.subr.bf16.mxu0 0
        %1832 = vmatpush1.bf16.msra.mxu0 %v1702
        %1833 = vmatprep.subr.bf16.mxu0 0
        %1834 = vmatpush1.bf16.msra.mxu0 %v1703
        %1835 = vmatprep.subr.bf16.mxu0 0
        %1836 = vmatpush1.bf16.msra.mxu0 %v1704
        %1837 = vmatprep.subr.bf16.mxu0 0
        %1838 = vmatpush1.bf16.msra.mxu0 %v1705
        %1839 = vmatprep.subr.bf16.mxu0 0
        %1840 = vmatpush1.bf16.msra.mxu0 %v1706
        %1841 = vmatprep.subr.bf16.mxu0 0
        %1842 = vmatpush1.bf16.msra.mxu0 %v1707
        %1843 = vmatprep.subr.bf16.mxu0 0
        %1844 = vmatpush1.bf16.msra.mxu0 %v1708
        %1845 = vmatprep.subr.bf16.mxu0 0
        %1846 = vmatpush1.bf16.msra.mxu0 %v1709
        %1847 = vmatprep.subr.bf16.mxu0 0
        %1848 = vmatpush1.bf16.msra.mxu0 %v1710
        %1849 = vmatprep.subr.bf16.mxu0 0
        %1850 = vmatpush1.bf16.msra.mxu0 %v1711
        %1851 = vmatprep.subr.bf16.mxu0 0
        %1852 = vmatpush1.bf16.msra.mxu0 %v1712
        %1853 = vmatprep.subr.bf16.mxu0 0
        %1854 = vmatpush1.bf16.msra.mxu0 %v1713
        %1855 = vmatprep.subr.bf16.mxu0 0
        %1856 = vmatpush1.bf16.msra.mxu0 %v1714
        %1857 = vmatprep.subr.bf16.mxu0 0
        %1858 = vmatpush1.bf16.msra.mxu0 %v1715
        %1859 = vmatprep.subr.bf16.mxu0 0
        %1860 = vmatpush1.bf16.msra.mxu0 %v1716
        %1861 = vmatprep.mubr.bf16.mxu0 %v1304
        %1862 = vmatmul.mubr.bf16.gmra.mrb[0].mxu0 %v1303
        %v1863 = vpop.f32.mrb[0].mxu0
        %v1864 = vadd.f32 %v1444, %v1863
        %v1865 = vpop.f32.mrb[0].mxu0
        %v1866 = vpop.f32.mrb[0].mxu0
        %v1867 = vpop.f32.mrb[0].mxu0
        %1868 = vdwg.mxu0
        %1869 = vmatprep.subr.bf16.mxu0 0
        %1870 = vmatpush1.bf16.msra.mxu0 %v1717
        %1871 = vmatprep.subr.bf16.mxu0 0
        %1872 = vmatpush1.bf16.msra.mxu0 %v1718
        %1873 = vmatprep.subr.bf16.mxu0 0
        %1874 = vmatpush1.bf16.msra.mxu0 %v1719
        %1875 = vmatprep.subr.bf16.mxu0 0
        %1876 = vmatpush1.bf16.msra.mxu0 %v1720
        %1877 = vmatprep.subr.bf16.mxu0 0
        %1878 = vmatpush1.bf16.msra.mxu0 %v1721
        %1879 = vmatprep.subr.bf16.mxu0 0
        %1880 = vmatpush1.bf16.msra.mxu0 %v1722
        %1881 = vmatprep.subr.bf16.mxu0 0
        %1882 = vmatpush1.bf16.msra.mxu0 %v1723
        %1883 = vmatprep.subr.bf16.mxu0 0
        %1884 = vmatpush1.bf16.msra.mxu0 %v1724
        %1885 = vmatprep.subr.bf16.mxu0 0
        %1886 = vmatpush1.bf16.msra.mxu0 %v1725
        %1887 = vmatprep.subr.bf16.mxu0 0
        %1888 = vmatpush1.bf16.msra.mxu0 %v1726
        %1889 = vmatprep.subr.bf16.mxu0 0
        %1890 = vmatpush1.bf16.msra.mxu0 %v1727
        %1891 = vmatprep.subr.bf16.mxu0 0
        %1892 = vmatpush1.bf16.msra.mxu0 %v1728
        %1893 = vmatprep.subr.bf16.mxu0 0
        %1894 = vmatpush1.bf16.msra.mxu0 %v1729
        %1895 = vmatprep.subr.bf16.mxu0 0
        %1896 = vmatpush1.bf16.msra.mxu0 %v1730
        %1897 = vmatprep.subr.bf16.mxu0 0
        %1898 = vmatpush1.bf16.msra.mxu0 %v1731
        %1899 = vmatprep.subr.bf16.mxu0 0
        %1900 = vmatpush1.bf16.msra.mxu0 %v1732
        %1901 = vmatprep.mubr.bf16.mxu0 %v1306
        %1902 = vmatmul.mubr.bf16.gmra.mrb[0].mxu0 %v1305
        %v1903 = vpop.f32.mrb[0].mxu0
        %v1904 = vadd.f32 %v1864, %v1903
        %v1905 = vpop.f32.mrb[0].mxu0
        %v1906 = vpop.f32.mrb[0].mxu0
        %v1907 = vpop.f32.mrb[0].mxu0
        %1908 = vdwg.mxu0
        %1909 = vmatprep.subr.bf16.mxu0 0
        %1910 = vmatpush1.bf16.msra.mxu0 %v1733
        %1911 = vmatprep.subr.bf16.mxu0 0
        %1912 = vmatpush1.bf16.msra.mxu0 %v1734
        %1913 = vmatprep.subr.bf16.mxu0 0
        %1914 = vmatpush1.bf16.msra.mxu0 %v1735
        %1915 = vmatprep.subr.bf16.mxu0 0
        %1916 = vmatpush1.bf16.msra.mxu0 %v1736
        %1917 = vmatprep.subr.bf16.mxu0 0
        %1918 = vmatpush1.bf16.msra.mxu0 %v1737
        %1919 = vmatprep.subr.bf16.mxu0 0
        %1920 = vmatpush1.bf16.msra.mxu0 %v1738
        %1921 = vmatprep.subr.bf16.mxu0 0
        %1922 = vmatpush1.bf16.msra.mxu0 %v1739
        %1923 = vmatprep.subr.bf16.mxu0 0
        %1924 = vmatpush1.bf16.msra.mxu0 %v1740
        %1925 = vmatprep.subr.bf16.mxu0 0
        %1926 = vmatpush1.bf16.msra.mxu0 %v1741
        %1927 = vmatprep.subr.bf16.mxu0 0
        %1928 = vmatpush1.bf16.msra.mxu0 %v1742
        %1929 = vmatprep.subr.bf16.mxu0 0
        %1930 = vmatpush1.bf16.msra.mxu0 %v1743
        %1931 = vmatprep.subr.bf16.mxu0 0
        %1932 = vmatpush1.bf16.msra.mxu0 %v1744
        %1933 = vmatprep.subr.bf16.mxu0 0
        %1934 = vmatpush1.bf16.msra.mxu0 %v1745
        %1935 = vmatprep.subr.bf16.mxu0 0
        %1936 = vmatpush1.bf16.msra.mxu0 %v1746
        %1937 = vmatprep.subr.bf16.mxu0 0
        %1938 = vmatpush1.bf16.msra.mxu0 %v1747
        %1939 = vmatprep.subr.bf16.mxu0 0
        %1940 = vmatpush1.bf16.msra.mxu0 %v1748
        %1941 = vmatprep.mubr.bf16.mxu0 %v1308
        %1942 = vmatmul.mubr.bf16.gmra.mrb[0].mxu0 %v1307
        %v1943 = vpop.f32.mrb[0].mxu0
        %v1944 = vadd.f32 %v1904, %v1943
        %v1945 = vpop.f32.mrb[0].mxu0
        %v1946 = vpop.f32.mrb[0].mxu0
        %v1947 = vpop.f32.mrb[0].mxu0
        %1948 = vdwg.mxu0
        %1949 = vmatprep.subr.bf16.mxu0 0
        %1950 = vmatpush1.bf16.msra.mxu0 %v1749
        %1951 = vmatprep.subr.bf16.mxu0 0
        %1952 = vmatpush1.bf16.msra.mxu0 %v1750
        %1953 = vmatprep.subr.bf16.mxu0 0
        %1954 = vmatpush1.bf16.msra.mxu0 %v1751
        %1955 = vmatprep.subr.bf16.mxu0 0
        %1956 = vmatpush1.bf16.msra.mxu0 %v1752
        %1957 = vmatprep.subr.bf16.mxu0 0
        %1958 = vmatpush1.bf16.msra.mxu0 %v1753
        %1959 = vmatprep.subr.bf16.mxu0 0
        %1960 = vmatpush1.bf16.msra.mxu0 %v1754
        %1961 = vmatprep.subr.bf16.mxu0 0
        %1962 = vmatpush1.bf16.msra.mxu0 %v1755
        %1963 = vmatprep.subr.bf16.mxu0 0
        %1964 = vmatpush1.bf16.msra.mxu0 %v1756
        %1965 = vmatprep.subr.bf16.mxu0 0
        %1966 = vmatpush1.bf16.msra.mxu0 %v1757
        %1967 = vmatprep.subr.bf16.mxu0 0
        %1968 = vmatpush1.bf16.msra.mxu0 %v1758
        %1969 = vmatprep.subr.bf16.mxu0 0
        %1970 = vmatpush1.bf16.msra.mxu0 %v1759
        %1971 = vmatprep.subr.bf16.mxu0 0
        %1972 = vmatpush1.bf16.msra.mxu0 %v1760
        %1973 = vmatprep.subr.bf16.mxu0 0
        %1974 = vmatpush1.bf16.msra.mxu0 %v1761
        %1975 = vmatprep.subr.bf16.mxu0 0
        %1976 = vmatpush1.bf16.msra.mxu0 %v1762
        %1977 = vmatprep.subr.bf16.mxu0 0
        %1978 = vmatpush1.bf16.msra.mxu0 %v1763
        %1979 = vmatprep.subr.bf16.mxu0 0
        %1980 = vmatpush1.bf16.msra.mxu0 %v1764
        %1981 = vmatprep.mubr.bf16.mxu0 %v1310
        %1982 = vmatmul.mubr.bf16.gmra.mrb[0].mxu0 %v1309
        %v1983 = vpop.f32.mrb[0].mxu0
        %v1984 = vadd.f32 %v1944, %v1983
        %v1985 = vpop.f32.mrb[0].mxu0
        %v1986 = vpop.f32.mrb[0].mxu0
        %v1987 = vpop.f32.mrb[0].mxu0
        %1988 = vdwg.mxu0
        %vm1989 = vcmask 64512
        %1990 = vst.msk [vmem:[%s207] sm:$0xff] %vm1989, %v1984
        %p1991 = scmp.lt.s32.totalorder %s16, 7
        %s1992 = scalar_select %p1991, %s16, 7
        %s1993 = smul.addr %s1992, 8
        %s1994 = scalar_lea.vmem %s4, %s1993
        // Predicated region
        $region41: #{att_feedforward.1} parent=35 // pred_check
          %p1995 = pneg %p123
        $region42: #{att_feedforward.1} parent=35 // pred_check_branch
          %1997 = sbr.rel (%p1995) target = $region44
        $region43: #{att_feedforward.1} parent=35 // pred_region
          _
        $region44: #{att_feedforward.1} parent=35 // pred_fallthru
          _
      $region36: #{att_feedforward.1} parent=5 // pred_fallthru
        _
      %p1998 = scmp.le.s32.totalorder 2, %s11
      // Predicated region
      $region45: #{att_feedforward.1} parent=5 // pred_check
        %p1999 = pneg %p1998
      $region46: #{att_feedforward.1} parent=5 // pred_check_branch
        %2001 = sbr.rel (%p1999) target = $region48
      $region47: #{att_feedforward.1} parent=5 // pred_region
        %s2002 = ssub.s32 %s11, 2
        // Predicated region
        $region49: #{att_feedforward.1} parent=47 // pred_check
          %p2003 = pneg %p129
        $region50: #{att_feedforward.1} parent=47 // pred_check_branch
          %2005 = sbr.rel (%p2003) target = $region52
        $region51: #{att_feedforward.1} parent=47 // pred_region
          %p2006 = scmp.lt.s32.totalorder %s17, 7
          %s2007 = scalar_select %p2006, %s17, 7
          %s2008 = smul.addr %s2007, 8
          %s2009 = scalar_lea.vmem %s4, %s2008
        $region52: #{att_feedforward.1} parent=47 // pred_fallthru
          _
      $region48: #{att_feedforward.1} parent=5 // pred_fallthru
        _
    $region6: #{att_feedforward.1} parent=1 // loop_footer
      %s15 = sadd.s32 1, %s11
    $region7: #{att_feedforward.1} parent=1 // loop_footer_branch
      %10 = sbr.rel target = $region3
    $region8: #{att_feedforward.1} parent=1 // loop_exit
      _
    %2010 = vsyncpa [#allocation3], 1
    %s2011 = scalar_lea.sflag [#allocation3], 1
    %2012 = vsyncpa %s2011, 1

</llo_original>
